<compile_context>
chip_gen: v7x
topology: tpu7x:2x2x1
jax: 0.10.0
libtpu: 0.0.40
codegen_flags: <defaults>
</compile_context>

<pallas_src>
import functools

import jax
import jax.numpy as jnp
from jax import lax
from jax.experimental import pallas as pl
from jax.experimental.pallas import tpu as pltpu


def _round_up(x, m):
    return ((x + m - 1) // m) * m


def _vmem_bytes_estimate(bB, v_block, S, T, Hp):
    """Rough per-core VMEM footprint for a (bB, v_block) tiling."""
    rows = bB * T
    db = 2  # BlockSpec double-buffering of pipelined inputs
    act = db * ((bB * S * Hp) * 2      # enc token embeddings (bf16)
                + (rows * Hp) * 2      # dec token embeddings (bf16)
                + (rows * Hp) * 2      # gathered w_out label columns (bf16)
                + (bB * S) * 4         # encoder attention mask (f32)
                + rows * 4)            # labels attention mask (f32)
    wts = db * (2 * Hp * Hp * 2 + 2 * Hp * 4)      # w_enc/w_dec + biases
    wout = db * (Hp * v_block * 2)                 # w_out tile (bf16)
    scratch = rows * Hp * 2 + 3 * rows * 4         # h_sc + m/l/lbl
    tmp = rows * v_block * 4                       # per-step logits tile (f32)
    out = db * bB * 4
    return act + wts + wout + scratch + tmp + out


def encdec_score_kernel(enc_emb_ref, dec_emb_ref, attn_mask_ref, lmask_ref,
                        w_lbl_ref, w_enc_ref, b_enc_ref, w_dec_ref, b_dec_ref,
                        w_out_ref, out_ref, h_sc, m_sc, l_sc, lbl_sc,
                        *, vocab_size, batch_tile, label_len, mask_cols):
    v = pl.program_id(1)
    n_v = pl.num_programs(1)
    Hp = w_enc_ref.shape[1]
    rows = batch_tile * label_len
    tV = w_out_ref.shape[1]

    # ---- first vocab tile of each batch tile: build decoder hidden states ----
    @pl.when(v == 0)
    def _():
        S = attn_mask_ref.shape[1]
        # Encoder: per-token projection (bf16 MXU, f32 accumulate) + tanh.
        enc = jnp.tanh(
            jnp.dot(enc_emb_ref[...], w_enc_ref[...],
                    preferred_element_type=jnp.float32)
            + b_enc_ref[...]).reshape(batch_tile, S, Hp)           # (bB,S,Hp) f32
        # Attention-masked mean pool over the source sequence.
        amask = attn_mask_ref[...]                                 # (bB,S,1) f32
        ctx = jnp.sum(enc * amask, axis=1) / jnp.maximum(
            jnp.sum(amask, axis=1), 1.0)                           # (bB,Hp) f32
        # Decoder: label embedding + encoder context, projection + tanh.
        dec_in = (dec_emb_ref[...].astype(jnp.float32)
                  .reshape(batch_tile, label_len, Hp) + ctx[:, None, :])
        h = jnp.tanh(
            jnp.dot(dec_in.reshape(rows, Hp).astype(jnp.bfloat16),
                    w_dec_ref[...], preferred_element_type=jnp.float32)
            + b_dec_ref[...])                                      # (rows,Hp) f32
        hb = h.astype(jnp.bfloat16)
        h_sc[...] = hb
        # Gathered label logit: logits[row, label[row]] = h[row] . w_out[:, label]
        # (w_out columns pre-gathered in the wrapper -> no (rows,V) gather).
        lbl_sc[...] = jnp.sum(
            hb.astype(jnp.float32) * w_lbl_ref[...].astype(jnp.float32),
            axis=-1, keepdims=True)                                # (rows,1)
        m_sc[...] = jnp.full(m_sc.shape, -jnp.inf, jnp.float32)
        l_sc[...] = jnp.zeros(l_sc.shape, jnp.float32)

    # ---- every vocab tile: online logsumexp over this slice of the vocab ----
    logits = jnp.dot(h_sc[...], w_out_ref[...],
                     preferred_element_type=jnp.float32)           # (rows,tV) f32
    if mask_cols:  # static: only emitted when the vocab was padded to a tile
        cols = lax.broadcasted_iota(jnp.int32, (1, tV), 1) + v * tV
        logits = jnp.where(cols < vocab_size, logits, -1e30)
    m_prev = m_sc[...]
    m_new = jnp.maximum(m_prev, jnp.max(logits, axis=-1, keepdims=True))
    l_sc[...] = (l_sc[...] * jnp.exp(m_prev - m_new)
                 + jnp.sum(jnp.exp(logits - m_new), axis=-1, keepdims=True))
    m_sc[...] = m_new

    # ---- last vocab tile: token_logp = label_logit - lse, masked sum over T ----
    @pl.when(v == n_v - 1)
    def _():
        lse = m_sc[...] + jnp.log(l_sc[...])                       # (rows,1)
        tok = (lbl_sc[...] - lse) * lmask_ref[...]                 # (rows,1)
        out_ref[...] = jnp.sum(tok.reshape(batch_tile, label_len),
                               axis=1, keepdims=True)              # (bB,1)


def encoder_decoder_forward(params, batch, *, v_block=2048):
    emb_f32 = params['embedding']
    V, H = emb_f32.shape

    # Pad the hidden dim only as far as the bf16 sublane pack requires when H
    # is small; to a lane multiple when H is already large.  Keeps the K dim of
    # w_out (the dominant HBM stream) un-inflated for tiny hidden sizes.
    Hp = _round_up(H, 128) if H >= 128 else _round_up(H, 16)
    hpad = Hp - H

    input_ids = batch['input_ids']
    labels = batch['labels']
    B, S = input_ids.shape
    T = labels.shape[1]

    # ---- per-chip VMEM budget ----
    try:
        vmem_cap = int(getattr(pltpu.get_tpu_info(), 'vmem_capacity_bytes'))
    except Exception:
        vmem_cap = 64 * 1024 * 1024            # conservative (v7x per-TC size)
    vmem_limit = min(vmem_cap * 3 // 4, 100 * 1024 * 1024)
    budget = int(vmem_limit * 0.8)

    # ---- vocab tile: multiple of 128, as large as the budget allows ----
    v_block = max(128, _round_up(min(v_block, _round_up(V, 128)), 128))
    while v_block > 128 and _vmem_bytes_estimate(8, v_block, S, T, Hp) > budget:
        v_block -= 128
    Vp = _round_up(V, v_block)
    nV = Vp // v_block

    # ---- batch tile: largest multiple of 8 dividing the padded batch that
    #      fits the budget (never a non-multiple-of-8 fallback) ----
    B_pad = _round_up(B, 8)
    cands = [d for d in range(8, B_pad + 1, 8) if B_pad % d == 0]
    fitting = [d for d in cands
               if _vmem_bytes_estimate(d, v_block, S, T, Hp) <= budget]
    bB = max(fitting) if fitting else 8
    # Prefer >= 2 batch tiles when the batch is big enough so the "parallel"
    # axis can shard across both TensorCores on v7x.
    if B_pad // bB == 1 and B_pad >= 16 and (B_pad // 2) % 8 == 0:
        bB = B_pad // 2
    nB = B_pad // bB

    # ---- batch padding (pad rows are fully masked -> contribute 0) ----
    pad_b = B_pad - B

    def pad_rows(a):
        if pad_b == 0:
            return a
        return jnp.pad(a, ((0, pad_b),) + tuple((0, 0) for _ in range(a.ndim - 1)))

    input_ids_p = pad_rows(input_ids)
    labels_p = pad_rows(labels)
    amask_p = pad_rows(batch['attention_mask'])
    lmask_p = pad_rows(batch['labels_attention_mask'])

    # bf16 weights (halves w_out DMA bytes, ~2x MXU rate); zero-padding exact.
    emb = jnp.pad(emb_f32, ((0, 0), (0, hpad))).astype(jnp.bfloat16)
    w_enc = jnp.pad(params['w_enc'], ((0, hpad), (0, hpad))).astype(jnp.bfloat16)
    w_dec = jnp.pad(params['w_dec'], ((0, hpad), (0, hpad))).astype(jnp.bfloat16)
    b_enc = jnp.pad(params['b_enc'], ((0, 0), (0, hpad))).astype(jnp.float32)
    b_dec = jnp.pad(params['b_dec'], ((0, 0), (0, hpad))).astype(jnp.float32)
    w_out = jnp.pad(params['w_out'],
                    ((0, hpad), (0, Vp - V))).astype(jnp.bfloat16)

    # Embedding gathers stay bf16 (half the HBM traffic of f32 activations).
    enc_emb = emb[input_ids_p].reshape(B_pad * S, Hp)              # (B_pad*S,Hp)
    dec_emb = emb[labels_p].reshape(B_pad * T, Hp)                 # (B_pad*T,Hp)
    # Pre-gather the w_out columns selected by the labels (label logit = h.w_lbl).
    w_lbl = jnp.take(w_out, labels_p.reshape(-1), axis=1).T        # (B_pad*T,Hp)

    amask = amask_p.astype(jnp.float32)[:, :, None]                # (B_pad,S,1)
    lmask = lmask_p.astype(jnp.float32).reshape(B_pad * T, 1)      # (B_pad*T,1)

    kernel = functools.partial(
        encdec_score_kernel,
        vocab_size=V, batch_tile=bB, label_len=T, mask_cols=(Vp != V))

    grid_spec = pltpu.PrefetchScalarGridSpec(
        num_scalar_prefetch=0,
        grid=(nB, nV),
        in_specs=[
            pl.BlockSpec((bB * S, Hp), lambda b, v: (b, 0)),       # enc token embeds
            pl.BlockSpec((bB * T, Hp), lambda b, v: (b, 0)),       # dec token embeds
            pl.BlockSpec((bB, S, 1), lambda b, v: (b, 0, 0)),      # encoder attn mask
            pl.BlockSpec((bB * T, 1), lambda b, v: (b, 0)),        # labels attn mask
            pl.BlockSpec((bB * T, Hp), lambda b, v: (b, 0)),       # w_out cols @ labels
            pl.BlockSpec((Hp, Hp), lambda b, v: (0, 0)),           # w_enc
            pl.BlockSpec((1, Hp), lambda b, v: (0, 0)),            # b_enc
            pl.BlockSpec((Hp, Hp), lambda b, v: (0, 0)),           # w_dec
            pl.BlockSpec((1, Hp), lambda b, v: (0, 0)),            # b_dec
            pl.BlockSpec((Hp, v_block), lambda b, v: (0, v)),      # w_out (V-tiled)
        ],
        out_specs=pl.BlockSpec((bB, 1), lambda b, v: (b, 0)),
        scratch_shapes=[
            pltpu.VMEM((bB * T, Hp), jnp.bfloat16),   # decoder hidden states
            pltpu.VMEM((bB * T, 1), jnp.float32),     # running max
            pltpu.VMEM((bB * T, 1), jnp.float32),     # running sum-exp
            pltpu.VMEM((bB * T, 1), jnp.float32),     # gathered label logit
        ],
    )

    seq_log_prob = pl.pallas_call(
        kernel,
        out_shape=jax.ShapeDtypeStruct((B_pad, 1), jnp.float32),
        grid_spec=grid_spec,
        compiler_params=pltpu.CompilerParams(
            dimension_semantics=("parallel", "arbitrary"),
            vmem_limit_bytes=vmem_limit,
        ),
    )(enc_emb, dec_emb, amask, lmask, w_lbl,
      w_enc, b_enc, w_dec, b_dec, w_out)

    # seq_log_prob.view(targets.size(0), -1).argmax(-1)   (tiny glue in JAX)
    num_targets = batch['targets'].shape[0]
    scores = seq_log_prob[:B, 0].reshape(num_targets, -1)
    predictions = jnp.argmax(scores, axis=-1)
    return predictions, scores


def reference_forward(params, batch):
    """Pure-JAX mirror (same bf16/f32 mixed precision) for verification."""
    emb = params['embedding'].astype(jnp.bfloat16)
    w_enc = params['w_enc'].astype(jnp.bfloat16)
    w_dec = params['w_dec'].astype(jnp.bfloat16)
    w_out = params['w_out'].astype(jnp.bfloat16)
    enc_emb = emb[batch['input_ids']]
    dec_emb = emb[batch['labels']]
    amask = batch['attention_mask'].astype(jnp.float32)[:, :, None]
    enc = jnp.tanh(jnp.einsum('bsh,hk->bsk', enc_emb, w_enc,
                              preferred_element_type=jnp.float32)
                   + params['b_enc'][0])
    ctx = jnp.sum(enc * amask, axis=1) / jnp.maximum(jnp.sum(amask, axis=1), 1.0)
    dec_in = (dec_emb.astype(jnp.float32) + ctx[:, None, :]).astype(jnp.bfloat16)
    h = jnp.tanh(jnp.einsum('bth,hk->btk', dec_in, w_dec,
                            preferred_element_type=jnp.float32)
                 + params['b_dec'][0])
    logits = jnp.einsum('bth,hv->btv', h.astype(jnp.bfloat16), w_out,
                        preferred_element_type=jnp.float32)
    lmask = batch['labels_attention_mask'].astype(jnp.float32)
    masked_log_probs = lmask[:, :, None] * jax.nn.log_softmax(logits, axis=-1)
    tok = jnp.take_along_axis(masked_log_probs,
                              batch['labels'][:, :, None], axis=-1)[..., 0]
    seq_log_prob = tok.sum(axis=-1)
    scores = seq_log_prob.reshape(batch['targets'].shape[0], -1)
    return jnp.argmax(scores, axis=-1), scores


if __name__ == "__main__":
    key = jax.random.PRNGKey(0)
    num_targets, num_cand = 2, 2
    B = num_targets * num_cand          # batch = targets * candidates
    S, T, H, V = 8, 8, 32, 250          # prefix len, label len, hidden, vocab
    ks = jax.random.split(key, 8)

    params = {
        'embedding': 0.1 * jax.random.normal(ks[0], (V, H), jnp.float32),
        'w_enc': jax.random.normal(ks[1], (H, H), jnp.float32) / jnp.sqrt(H),
        'b_enc': 0.01 * jax.random.normal(ks[2], (1, H), jnp.float32),
        'w_dec': jax.random.normal(ks[3], (H, H), jnp.float32) / jnp.sqrt(H),
        'b_dec': 0.01 * jax.random.normal(ks[4], (1, H), jnp.float32),
        'w_out': jax.random.normal(ks[5], (H, V), jnp.float32) / jnp.sqrt(H),
    }

    batch = {
        'input_ids': jax.random.randint(ks[6], (B, S), 0, V, jnp.int32),
        'labels': jax.random.randint(ks[7], (B, T), 0, V, jnp.int32),
        'attention_mask': jnp.ones((B, S), jnp.int32).at[:, S - 2:].set(0),
        'labels_attention_mask': jnp.ones((B, T), jnp.int32).at[:, T - 3:].set(0),
        'targets': jnp.arange(num_targets, dtype=jnp.int32),
    }

    # v_block=128 with V=250 -> two vocab tiles, exercising both the online
    # logsumexp accumulation and the padded-vocab-column masking path.
    preds, scores = encoder_decoder_forward(params, batch, v_block=128)
    preds = jax.block_until_ready(preds)
    scores = jax.block_until_ready(scores)

    ref_preds, ref_scores = reference_forward(params, batch)
    assert jnp.allclose(scores, ref_scores, rtol=1e-2, atol=1e-2), (scores, ref_scores)
    assert jnp.array_equal(preds, ref_preds), (preds, ref_preds)
    print("KERNEL_OK")
</pallas_src>

<mosaic_0001>
module attributes {stable_mosaic.version = 11 : i64} {
  func.func @encdec_score_kernel(%arg0: i32, %arg1: i32, %arg2: memref<64x32xbf16, #tpu.memory_space<vmem>>, %arg3: memref<64x32xbf16, #tpu.memory_space<vmem>>, %arg4: memref<8x8x1xf32, #tpu.memory_space<vmem>>, %arg5: memref<64x1xf32, #tpu.memory_space<vmem>>, %arg6: memref<64x32xbf16, #tpu.memory_space<vmem>>, %arg7: memref<32x32xbf16, #tpu.memory_space<vmem>>, %arg8: memref<1x32xf32, #tpu.memory_space<vmem>>, %arg9: memref<32x32xbf16, #tpu.memory_space<vmem>>, %arg10: memref<1x32xf32, #tpu.memory_space<vmem>>, %arg11: memref<32x128xbf16, #tpu.memory_space<vmem>>, %arg12: memref<8x1xf32, #tpu.memory_space<vmem>>, %arg13: memref<64x32xbf16, #tpu.memory_space<vmem>>, %arg14: memref<64x1xf32, #tpu.memory_space<vmem>>, %arg15: memref<64x1xf32, #tpu.memory_space<vmem>>, %arg16: memref<64x1xf32, #tpu.memory_space<vmem>>) attributes {dimension_semantics = [#tpu.dimension_semantics<parallel>, #tpu.dimension_semantics<arbitrary>], iteration_bounds = array<i64: 1, 2>, scalar_prefetch = 0 : i64, scratch_operands = 4 : i64, tpu.core_type = #tpu.core_type<tc>, window_params = [{transform_indices = @transform_0, window_bounds = array<i64: 64, 32>}, {transform_indices = @transform_1, window_bounds = array<i64: 64, 32>}, {transform_indices = @transform_2, window_bounds = array<i64: 8, 8, 1>}, {transform_indices = @transform_3, window_bounds = array<i64: 64, 1>}, {transform_indices = @transform_4, window_bounds = array<i64: 64, 32>}, {pipeline_mode = #tpu.pipeline_mode<synchronous>, transform_indices = @transform_5, window_bounds = array<i64: 32, 32>}, {pipeline_mode = #tpu.pipeline_mode<synchronous>, transform_indices = @transform_6, window_bounds = array<i64: 1, 32>}, {pipeline_mode = #tpu.pipeline_mode<synchronous>, transform_indices = @transform_7, window_bounds = array<i64: 32, 32>}, {pipeline_mode = #tpu.pipeline_mode<synchronous>, transform_indices = @transform_8, window_bounds = array<i64: 1, 32>}, {transform_indices = @transform_9, window_bounds = array<i64: 32, 128>}, {transform_indices = @transform_10, window_bounds = array<i64: 8, 1>}]} {
    %c0_i32 = arith.constant 0 : i32
    %0 = arith.cmpi eq, %arg1, %c0_i32 : i32
    %1 = arith.extui %0 : i1 to i32
    %c0_i32_0 = arith.constant 0 : i32
    %2 = arith.cmpi ne, %1, %c0_i32_0 : i32
    scf.if %2 {
      %c0_16 = arith.constant 0 : index
      %c0_17 = arith.constant 0 : index
      %35 = vector.load %arg2[%c0_16, %c0_17] : memref<64x32xbf16, #tpu.memory_space<vmem>>, vector<64x32xbf16>
      %c0_18 = arith.constant 0 : index
      %c0_19 = arith.constant 0 : index
      %36 = vector.load %arg7[%c0_18, %c0_19] : memref<32x32xbf16, #tpu.memory_space<vmem>>, vector<32x32xbf16>
      %cst_20 = arith.constant dense<0.000000e+00> : vector<64x32xf32>
      %37 = tpu.matmul %35, %36, %cst_20 {dimension_numbers = #tpu.dot_dimension_numbers<[1], [0], [0], [1], [0, 0, 1, 1], [], []>} : vector<64x32xbf16>, vector<32x32xbf16>, vector<64x32xf32> -> vector<64x32xf32>
      %c0_21 = arith.constant 0 : index
      %c0_22 = arith.constant 0 : index
      %38 = vector.load %arg8[%c0_21, %c0_22] : memref<1x32xf32, #tpu.memory_space<vmem>>, vector<1x32xf32>
      %39 = vector.broadcast %38 : vector<1x32xf32> to vector<64x32xf32>
      %40 = arith.addf %37, %39 : vector<64x32xf32>
      %41 = math.tanh %40 : vector<64x32xf32>
      %42 = vector.shape_cast %41 : vector<64x32xf32> to vector<8x8x32xf32>
      %c0_23 = arith.constant 0 : index
      %c0_24 = arith.constant 0 : index
      %c0_25 = arith.constant 0 : index
      %43 = vector.load %arg4[%c0_23, %c0_24, %c0_25] : memref<8x8x1xf32, #tpu.memory_space<vmem>>, vector<8x8x1xf32>
      %44 = vector.broadcast %43 : vector<8x8x1xf32> to vector<8x8x32xf32>
      %45 = arith.mulf %42, %44 : vector<8x8x32xf32>
      %cst_26 = arith.constant dense<0.000000e+00> : vector<8x32xf32>
      %46 = vector.multi_reduction <add>, %45, %cst_26 [1] : vector<8x8x32xf32> to vector<8x32xf32>
      %cst_27 = arith.constant dense<0.000000e+00> : vector<8x1xf32>
      %47 = vector.multi_reduction <add>, %43, %cst_27 [1] : vector<8x8x1xf32> to vector<8x1xf32>
      %cst_28 = arith.constant 1.000000e+00 : f32
      %48 = vector.broadcast %cst_28 : f32 to vector<8x1xf32>
      %49 = arith.maximumf %47, %48 : vector<8x1xf32>
      %50 = vector.broadcast %49 : vector<8x1xf32> to vector<8x32xf32>
      %51 = arith.divf %46, %50 : vector<8x32xf32>
      %c0_29 = arith.constant 0 : index
      %c0_30 = arith.constant 0 : index
      %52 = vector.load %arg3[%c0_29, %c0_30] : memref<64x32xbf16, #tpu.memory_space<vmem>>, vector<64x32xbf16>
      %53 = arith.extf %52 : vector<64x32xbf16> to vector<64x32xf32>
      %54 = vector.shape_cast %53 : vector<64x32xf32> to vector<8x8x32xf32>
      %55 = vector.shape_cast %51 : vector<8x32xf32> to vector<8x1x32xf32>
      %56 = vector.broadcast %55 : vector<8x1x32xf32> to vector<8x8x32xf32>
      %57 = arith.addf %54, %56 : vector<8x8x32xf32>
      %58 = vector.shape_cast %57 : vector<8x8x32xf32> to vector<64x32xf32>
      %59 = arith.truncf %58 : vector<64x32xf32> to vector<64x32xbf16>
      %c0_31 = arith.constant 0 : index
      %c0_32 = arith.constant 0 : index
      %60 = vector.load %arg9[%c0_31, %c0_32] : memref<32x32xbf16, #tpu.memory_space<vmem>>, vector<32x32xbf16>
      %cst_33 = arith.constant dense<0.000000e+00> : vector<64x32xf32>
      %61 = tpu.matmul %59, %60, %cst_33 {dimension_numbers = #tpu.dot_dimension_numbers<[1], [0], [0], [1], [0, 0, 1, 1], [], []>} : vector<64x32xbf16>, vector<32x32xbf16>, vector<64x32xf32> -> vector<64x32xf32>
      %c0_34 = arith.constant 0 : index
      %c0_35 = arith.constant 0 : index
      %62 = vector.load %arg10[%c0_34, %c0_35] : memref<1x32xf32, #tpu.memory_space<vmem>>, vector<1x32xf32>
      %63 = vector.broadcast %62 : vector<1x32xf32> to vector<64x32xf32>
      %64 = arith.addf %61, %63 : vector<64x32xf32>
      %65 = math.tanh %64 : vector<64x32xf32>
      %66 = arith.truncf %65 : vector<64x32xf32> to vector<64x32xbf16>
      %c0_36 = arith.constant 0 : index
      %c0_37 = arith.constant 0 : index
      %67 = vector.load %arg13[%c0_36, %c0_37] : memref<64x32xbf16, #tpu.memory_space<vmem>>, vector<64x32xbf16>
      tpu.vector_store %arg13[%c0_36, %c0_37], %66 {strides = array<i32>} : memref<64x32xbf16, #tpu.memory_space<vmem>>, vector<64x32xbf16>,
      %68 = arith.extf %66 : vector<64x32xbf16> to vector<64x32xf32>
      %c0_38 = arith.constant 0 : index
      %c0_39 = arith.constant 0 : index
      %69 = vector.load %arg6[%c0_38, %c0_39] : memref<64x32xbf16, #tpu.memory_space<vmem>>, vector<64x32xbf16>
      %70 = arith.extf %69 : vector<64x32xbf16> to vector<64x32xf32>
      %71 = arith.mulf %68, %70 : vector<64x32xf32>
      %cst_40 = arith.constant dense<0.000000e+00> : vector<64xf32>
      %72 = vector.multi_reduction <add>, %71, %cst_40 [1] : vector<64x32xf32> to vector<64xf32>
      %73 = vector.shape_cast %72 : vector<64xf32> to vector<64x1xf32>
      %c0_41 = arith.constant 0 : index
      %c0_42 = arith.constant 0 : index
      %74 = vector.load %arg16[%c0_41, %c0_42] : memref<64x1xf32, #tpu.memory_space<vmem>>, vector<64x1xf32>
      tpu.vector_store %arg16[%c0_41, %c0_42], %73 {strides = array<i32>} : memref<64x1xf32, #tpu.memory_space<vmem>>, vector<64x1xf32>,
      %cst_43 = arith.constant 0xFF800000 : f32
      %75 = vector.broadcast %cst_43 : f32 to vector<64x1xf32>
      %c0_44 = arith.constant 0 : index
      %c0_45 = arith.constant 0 : index
      %76 = vector.load %arg14[%c0_44, %c0_45] : memref<64x1xf32, #tpu.memory_space<vmem>>, vector<64x1xf32>
      tpu.vector_store %arg14[%c0_44, %c0_45], %75 {strides = array<i32>} : memref<64x1xf32, #tpu.memory_space<vmem>>, vector<64x1xf32>,
      %cst_46 = arith.constant 0.000000e+00 : f32
      %77 = vector.broadcast %cst_46 : f32 to vector<64x1xf32>
      %c0_47 = arith.constant 0 : index
      %c0_48 = arith.constant 0 : index
      %78 = vector.load %arg15[%c0_47, %c0_48] : memref<64x1xf32, #tpu.memory_space<vmem>>, vector<64x1xf32>
      tpu.vector_store %arg15[%c0_47, %c0_48], %77 {strides = array<i32>} : memref<64x1xf32, #tpu.memory_space<vmem>>, vector<64x1xf32>,
    } else {
    }
    %c0 = arith.constant 0 : index
    %c0_1 = arith.constant 0 : index
    %3 = vector.load %arg13[%c0, %c0_1] : memref<64x32xbf16, #tpu.memory_space<vmem>>, vector<64x32xbf16>
    %c0_2 = arith.constant 0 : index
    %c0_3 = arith.constant 0 : index
    %4 = vector.load %arg11[%c0_2, %c0_3] : memref<32x128xbf16, #tpu.memory_space<vmem>>, vector<32x128xbf16>
    %cst = arith.constant dense<0.000000e+00> : vector<64x128xf32>
    %5 = tpu.matmul %3, %4, %cst {dimension_numbers = #tpu.dot_dimension_numbers<[1], [0], [0], [1], [0, 0, 1, 1], [], []>} : vector<64x32xbf16>, vector<32x128xbf16>, vector<64x128xf32> -> vector<64x128xf32>
    %6 = tpu.iota {dimensions = array<i32: 1>} : vector<1x128xi32>
    %c128_i32 = arith.constant 128 : i32
    %7 = arith.muli %arg1, %c128_i32 : i32
    %8 = vector.broadcast %7 : i32 to vector<1x128xi32>
    %9 = arith.addi %6, %8 : vector<1x128xi32>
    %c250_i32 = arith.constant 250 : i32
    %10 = vector.broadcast %c250_i32 : i32 to vector<1x128xi32>
    %11 = arith.cmpi slt, %9, %10 : vector<1x128xi32>
    %cst_4 = arith.constant -1.000000e+30 : f32
    %12 = vector.shape_cast %11 : vector<1x128xi1> to vector<1x128xi1>
    %13 = vector.broadcast %12 : vector<1x128xi1> to vector<64x128xi1>
    %14 = vector.broadcast %cst_4 : f32 to vector<64x128xf32>
    %15 = arith.select %13, %5, %14 : vector<64x128xi1>, vector<64x128xf32>
    %c0_5 = arith.constant 0 : index
    %c0_6 = arith.constant 0 : index
    %16 = vector.load %arg14[%c0_5, %c0_6] : memref<64x1xf32, #tpu.memory_space<vmem>>, vector<64x1xf32>
    %cst_7 = arith.constant dense<0xFF800000> : vector<64xf32>
    %17 = vector.multi_reduction <maximumf>, %15, %cst_7 [1] : vector<64x128xf32> to vector<64xf32>
    %18 = vector.shape_cast %17 : vector<64xf32> to vector<64x1xf32>
    %19 = arith.maximumf %16, %18 : vector<64x1xf32>
    %c0_8 = arith.constant 0 : index
    %c0_9 = arith.constant 0 : index
    %20 = vector.load %arg15[%c0_8, %c0_9] : memref<64x1xf32, #tpu.memory_space<vmem>>, vector<64x1xf32>
    %21 = arith.subf %16, %19 : vector<64x1xf32>
    %22 = math.exp %21 : vector<64x1xf32>
    %23 = arith.mulf %20, %22 : vector<64x1xf32>
    %24 = vector.broadcast %19 : vector<64x1xf32> to vector<64x128xf32>
    %25 = arith.subf %15, %24 : vector<64x128xf32>
    %26 = math.exp %25 : vector<64x128xf32>
    %cst_10 = arith.constant dense<0.000000e+00> : vector<64xf32>
    %27 = vector.multi_reduction <add>, %26, %cst_10 [1] : vector<64x128xf32> to vector<64xf32>
    %28 = vector.shape_cast %27 : vector<64xf32> to vector<64x1xf32>
    %29 = arith.addf %23, %28 : vector<64x1xf32>
    %c0_11 = arith.constant 0 : index
    %c0_12 = arith.constant 0 : index
    %30 = vector.load %arg15[%c0_11, %c0_12] : memref<64x1xf32, #tpu.memory_space<vmem>>, vector<64x1xf32>
    tpu.vector_store %arg15[%c0_11, %c0_12], %29 {strides = array<i32>} : memref<64x1xf32, #tpu.memory_space<vmem>>, vector<64x1xf32>,
    %c0_13 = arith.constant 0 : index
    %c0_14 = arith.constant 0 : index
    %31 = vector.load %arg14[%c0_13, %c0_14] : memref<64x1xf32, #tpu.memory_space<vmem>>, vector<64x1xf32>
    tpu.vector_store %arg14[%c0_13, %c0_14], %19 {strides = array<i32>} : memref<64x1xf32, #tpu.memory_space<vmem>>, vector<64x1xf32>,
    %c1_i32 = arith.constant 1 : i32
    %32 = arith.cmpi eq, %arg1, %c1_i32 : i32
    %33 = arith.extui %32 : i1 to i32
    %c0_i32_15 = arith.constant 0 : i32
    %34 = arith.cmpi ne, %33, %c0_i32_15 : i32
    scf.if %34 {
      %c0_16 = arith.constant 0 : index
      %c0_17 = arith.constant 0 : index
      %35 = vector.load %arg14[%c0_16, %c0_17] : memref<64x1xf32, #tpu.memory_space<vmem>>, vector<64x1xf32>
      %c0_18 = arith.constant 0 : index
      %c0_19 = arith.constant 0 : index
      %36 = vector.load %arg15[%c0_18, %c0_19] : memref<64x1xf32, #tpu.memory_space<vmem>>, vector<64x1xf32>
      %37 = math.log %36 : vector<64x1xf32>
      %38 = arith.addf %35, %37 : vector<64x1xf32>
      %c0_20 = arith.constant 0 : index
      %c0_21 = arith.constant 0 : index
      %39 = vector.load %arg16[%c0_20, %c0_21] : memref<64x1xf32, #tpu.memory_space<vmem>>, vector<64x1xf32>
      %40 = arith.subf %39, %38 : vector<64x1xf32>
      %c0_22 = arith.constant 0 : index
      %c0_23 = arith.constant 0 : index
      %41 = vector.load %arg5[%c0_22, %c0_23] : memref<64x1xf32, #tpu.memory_space<vmem>>, vector<64x1xf32>
      %42 = arith.mulf %40, %41 : vector<64x1xf32>
      %43 = vector.shape_cast %42 : vector<64x1xf32> to vector<8x8xf32>
      %cst_24 = arith.constant dense<0.000000e+00> : vector<8xf32>
      %44 = vector.multi_reduction <add>, %43, %cst_24 [1] : vector<8x8xf32> to vector<8xf32>
      %45 = vector.shape_cast %44 : vector<8xf32> to vector<8x1xf32>
      %c0_25 = arith.constant 0 : index
      %c0_26 = arith.constant 0 : index
      %46 = vector.load %arg12[%c0_25, %c0_26] : memref<8x1xf32, #tpu.memory_space<vmem>>, vector<8x1xf32>
      tpu.vector_store %arg12[%c0_25, %c0_26], %45 {strides = array<i32>} : memref<8x1xf32, #tpu.memory_space<vmem>>, vector<8x1xf32>,
    } else {
    }
    return
  }
  func.func @transform_0(%arg0: i32, %arg1: i32) -> (i32, i32) {
    %c0_i32 = arith.constant 0 : i32
    %c0_i32_0 = arith.constant 0 : i32
    return %arg0, %c0_i32 : i32, i32
  }
  func.func @transform_1(%arg0: i32, %arg1: i32) -> (i32, i32) {
    %c0_i32 = arith.constant 0 : i32
    %c0_i32_0 = arith.constant 0 : i32
    return %arg0, %c0_i32 : i32, i32
  }
  func.func @transform_2(%arg0: i32, %arg1: i32) -> (i32, i32, i32) {
    %c0_i32 = arith.constant 0 : i32
    %c0_i32_0 = arith.constant 0 : i32
    %c0_i32_1 = arith.constant 0 : i32
    return %arg0, %c0_i32, %c0_i32_0 : i32, i32, i32
  }
  func.func @transform_3(%arg0: i32, %arg1: i32) -> (i32, i32) {
    %c0_i32 = arith.constant 0 : i32
    %c0_i32_0 = arith.constant 0 : i32
    return %arg0, %c0_i32 : i32, i32
  }
  func.func @transform_4(%arg0: i32, %arg1: i32) -> (i32, i32) {
    %c0_i32 = arith.constant 0 : i32
    %c0_i32_0 = arith.constant 0 : i32
    return %arg0, %c0_i32 : i32, i32
  }
  func.func @transform_5(%arg0: i32, %arg1: i32) -> (i32, i32) {
    %c0_i32 = arith.constant 0 : i32
    %c0_i32_0 = arith.constant 0 : i32
    %c0_i32_1 = arith.constant 0 : i32
    return %c0_i32, %c0_i32_0 : i32, i32
  }
  func.func @transform_6(%arg0: i32, %arg1: i32) -> (i32, i32) {
    %c0_i32 = arith.constant 0 : i32
    %c0_i32_0 = arith.constant 0 : i32
    %c0_i32_1 = arith.constant 0 : i32
    return %c0_i32, %c0_i32_0 : i32, i32
  }
  func.func @transform_7(%arg0: i32, %arg1: i32) -> (i32, i32) {
    %c0_i32 = arith.constant 0 : i32
    %c0_i32_0 = arith.constant 0 : i32
    %c0_i32_1 = arith.constant 0 : i32
    return %c0_i32, %c0_i32_0 : i32, i32
  }
  func.func @transform_8(%arg0: i32, %arg1: i32) -> (i32, i32) {
    %c0_i32 = arith.constant 0 : i32
    %c0_i32_0 = arith.constant 0 : i32
    %c0_i32_1 = arith.constant 0 : i32
    return %c0_i32, %c0_i32_0 : i32, i32
  }
  func.func @transform_9(%arg0: i32, %arg1: i32) -> (i32, i32) {
    %c0_i32 = arith.constant 0 : i32
    %c0_i32_0 = arith.constant 0 : i32
    return %c0_i32, %arg1 : i32, i32
  }
  func.func @transform_10(%arg0: i32, %arg1: i32) -> (i32, i32) {
    %c0_i32 = arith.constant 0 : i32
    %c0_i32_0 = arith.constant 0 : i32
    return %arg0, %c0_i32 : i32, i32
  }
}

</mosaic_0001>

<llo_original>
// kernel: tpu_custom_call.1
$region0: #{tpu_custom_call.1}
  #allocation0 [shape = 'u32[]', space=smem, size = 0x4, offset = 0x4, fixed_abs, tag = 'smem constant byte address 0x4 - core index']
  #allocation1 [shape = 'u32[144,128]{1,0:T(1,128)}', space=vmem, size = 0x12000, scoped, tag = 'internal scratch']
  #allocation2 [shape = 'bf16[64,32]{1,0:T(16,128)(2,1)}', space=vmem, size = 0x4000, scoped, tag = 'scratch operand']
  #allocation3 [shape = 'f32[64,1]{1,0:T(8,128)}', space=vmem, size = 0x8000, scoped, tag = 'scratch operand']
  #allocation4 [shape = 'f32[64,1]{1,0:T(8,128)}', space=vmem, size = 0x8000, scoped, tag = 'scratch operand']
  #allocation5 [shape = 'f32[64,1]{1,0:T(8,128)}', space=vmem, size = 0x8000, scoped, tag = 'scratch operand']
  %s0 = inlined_call_operand.vmem [shape: bf16[64,32], index: 0, kind: input, shape index: {}]
  %s1 = inlined_call_operand.vmem [shape: bf16[64,32], index: 1, kind: input, shape index: {}]
  %s2 = inlined_call_operand.vmem [shape: f32[8,8,1], index: 2, kind: input, shape index: {}]
  %s3 = inlined_call_operand.vmem [shape: f32[64,1], index: 3, kind: input, shape index: {}]
  %s4 = inlined_call_operand.vmem [shape: bf16[64,32], index: 4, kind: input, shape index: {}]
  %s5 = inlined_call_operand.vmem [shape: bf16[32,32], index: 5, kind: input, shape index: {}]
  %s6 = inlined_call_operand.vmem [shape: f32[1,32], index: 6, kind: input, shape index: {}]
  %s7 = inlined_call_operand.vmem [shape: bf16[32,32], index: 7, kind: input, shape index: {}]
  %s8 = inlined_call_operand.vmem [shape: f32[1,32], index: 8, kind: input, shape index: {}]
  %s9 = inlined_call_operand.vmem [shape: bf16[32,256], index: 9, kind: input, shape index: {}]
  %s10 = inlined_call_operand.vmem [shape: f32[8,1], index: 10, kind: output, shape index: {}]
  %s11 = sld [smem:[#allocation0]]
  $region122: #{tpu_custom_call.1} parent=0
    _
  %s13 = ssub.s32 1, %s11
  %s14 = scalar_select 0, %s13, %s11
  $region1: #{tpu_custom_call.1} parent=0
    #allocation6 [shape = 'u8[16384]{0}', space=vmem, size = 0x4000, scoped, tag = 'input window, operand 9']
    loop: start=0, step=1, limit=4
    $region2: #{tpu_custom_call.1} parent=1 // loop_pre_header
      _
    $region3: #{tpu_custom_call.1} parent=1 // loop_header
      %s16 = sphi 0, %s20
      %p17 = scmp.ge.s32.totalorder %s16, 4
      %s23 = sphi 0, %s35
      %s24 = sphi 0, %s31
      %s25 = sphi 0, %s23
      %s26 = sphi 0, %s24
      %s27 = sphi 0, %s25
      %s28 = sphi 0, %s26
      %s38 = sphi 0, %s40
      %s41 = sphi 0, %s38
      %s42 = sphi 0, %s41
      %s58 = sphi 0, %s42
      %s64 = sphi 0, %s66
      %s67 = sphi 0, %s64
      %s68 = sphi 0, %s67
      %s84 = sphi 0, %s68
      %s90 = sphi 0, %s92
      %s93 = sphi 0, %s90
      %s94 = sphi 0, %s93
      %s110 = sphi 0, %s94
      %s116 = sphi 0, %s118
      %s119 = sphi 0, %s116
      %s120 = sphi 0, %s119
      %s136 = sphi 0, %s120
      %s142 = sphi 0, %s144
      %s145 = sphi 0, %s142
      %s146 = sphi 0, %s145
      %s162 = sphi 0, %s146
      %s166 = sphi 0, %s166
      %s168 = sphi 0, %s166
      %s169 = sphi 0, %s168
      %s183 = sphi 0, %s169
      %s187 = sphi 0, %s187
      %s189 = sphi 0, %s187
      %s190 = sphi 0, %s189
      %s204 = sphi 0, %s190
      %s208 = sphi 0, %s208
      %s210 = sphi 0, %s208
      %s211 = sphi 0, %s210
      %s225 = sphi 0, %s211
      %s229 = sphi 0, %s229
      %s231 = sphi 0, %s229
      %s232 = sphi 0, %s231
      %s246 = sphi 0, %s232
      %s252 = sphi 0, %s254
      %s255 = sphi 0, %s252
      %s256 = sphi 0, %s255
      %s272 = sphi 0, %s256
      %s278 = sphi 0, %s280
      %s281 = sphi 0, %s278
      %s282 = sphi 0, %s281
      %s298 = sphi 0, %s282
    $region4: #{tpu_custom_call.1} parent=1 // loop_header_branch
      %19 = sbr.rel (%p17) target = $region8
    $region5: #{tpu_custom_call.1} parent=1 // loop_body
      %s21 = ssub.s32 %s16, 1
      %s22 = ssub.s32 %s16, 2
      %s29 = sadd.s32 1, %s24
      %p30 = scmp.ge.s32.totalorder %s29, 2
      %s31 = scalar_select %p30, 0, %s29
      %s32 = sadd.s32 1, %s23
      %s33 = scalar_select %p30, %s32, %s23
      %p34 = scmp.ge.s32.totalorder %s33, 1
      %s35 = scalar_select %p34, 0, %s33
      %s36 = ssub.s32 %s23, %s35
      %p37 = scmp.eq.s32.totalorder %s36, 0
      %s39 = sadd.s32 %s38, 1
      %s40 = scalar_select %p37, %s38, %s39
      %p43 = pneg %p37
      %p44 = scmp.eq.s32.totalorder %s16, 1
      %p45 = por %p43, %p44
      %p46 = scmp.ne.s32.totalorder %s38, %s41
      %p47 = scmp.eq.s32.totalorder %s16, 0
      %p48 = por %p46, %p47
      %p49 = scmp.ne.s32.totalorder %s38, %s41
      %p50 = scmp.eq.s32.totalorder %s21, 1
      %p51 = por %p49, %p50
      %p52 = scmp.ne.s32.totalorder %s41, %s42
      %p53 = scmp.eq.s32.totalorder %s21, 0
      %p54 = por %p52, %p53
      %p55 = scmp.ne.s32.totalorder %s41, %s42
      %p56 = scmp.eq.s32.totalorder %s22, 1
      %p57 = por %p55, %p56
      %p59 = scmp.ne.s32.totalorder %s42, %s58
      %p60 = scmp.eq.s32.totalorder %s22, 0
      %p61 = por %p59, %p60
      %s62 = ssub.s32 %s23, %s35
      %p63 = scmp.eq.s32.totalorder %s62, 0
      %s65 = sadd.s32 %s64, 1
      %s66 = scalar_select %p63, %s64, %s65
      %p69 = pneg %p63
      %p70 = scmp.eq.s32.totalorder %s16, 1
      %p71 = por %p69, %p70
      %p72 = scmp.ne.s32.totalorder %s64, %s67
      %p73 = scmp.eq.s32.totalorder %s16, 0
      %p74 = por %p72, %p73
      %p75 = scmp.ne.s32.totalorder %s64, %s67
      %p76 = scmp.eq.s32.totalorder %s21, 1
      %p77 = por %p75, %p76
      %p78 = scmp.ne.s32.totalorder %s67, %s68
      %p79 = scmp.eq.s32.totalorder %s21, 0
      %p80 = por %p78, %p79
      %p81 = scmp.ne.s32.totalorder %s67, %s68
      %p82 = scmp.eq.s32.totalorder %s22, 1
      %p83 = por %p81, %p82
      %p85 = scmp.ne.s32.totalorder %s68, %s84
      %p86 = scmp.eq.s32.totalorder %s22, 0
      %p87 = por %p85, %p86
      %s88 = ssub.s32 %s23, %s35
      %p89 = scmp.eq.s32.totalorder %s88, 0
      %s91 = sadd.s32 %s90, 1
      %s92 = scalar_select %p89, %s90, %s91
      %p95 = pneg %p89
      %p96 = scmp.eq.s32.totalorder %s16, 1
      %p97 = por %p95, %p96
      %p98 = scmp.ne.s32.totalorder %s90, %s93
      %p99 = scmp.eq.s32.totalorder %s16, 0
      %p100 = por %p98, %p99
      %p101 = scmp.ne.s32.totalorder %s90, %s93
      %p102 = scmp.eq.s32.totalorder %s21, 1
      %p103 = por %p101, %p102
      %p104 = scmp.ne.s32.totalorder %s93, %s94
      %p105 = scmp.eq.s32.totalorder %s21, 0
      %p106 = por %p104, %p105
      %p107 = scmp.ne.s32.totalorder %s93, %s94
      %p108 = scmp.eq.s32.totalorder %s22, 1
      %p109 = por %p107, %p108
      %p111 = scmp.ne.s32.totalorder %s94, %s110
      %p112 = scmp.eq.s32.totalorder %s22, 0
      %p113 = por %p111, %p112
      %s114 = ssub.s32 %s23, %s35
      %p115 = scmp.eq.s32.totalorder %s114, 0
      %s117 = sadd.s32 %s116, 1
      %s118 = scalar_select %p115, %s116, %s117
      %p121 = pneg %p115
      %p122 = scmp.eq.s32.totalorder %s16, 1
      %p123 = por %p121, %p122
      %p124 = scmp.ne.s32.totalorder %s116, %s119
      %p125 = scmp.eq.s32.totalorder %s16, 0
      %p126 = por %p124, %p125
      %p127 = scmp.ne.s32.totalorder %s116, %s119
      %p128 = scmp.eq.s32.totalorder %s21, 1
      %p129 = por %p127, %p128
      %p130 = scmp.ne.s32.totalorder %s119, %s120
      %p131 = scmp.eq.s32.totalorder %s21, 0
      %p132 = por %p130, %p131
      %p133 = scmp.ne.s32.totalorder %s119, %s120
      %p134 = scmp.eq.s32.totalorder %s22, 1
      %p135 = por %p133, %p134
      %p137 = scmp.ne.s32.totalorder %s120, %s136
      %p138 = scmp.eq.s32.totalorder %s22, 0
      %p139 = por %p137, %p138
      %s140 = ssub.s32 %s23, %s35
      %p141 = scmp.eq.s32.totalorder %s140, 0
      %s143 = sadd.s32 %s142, 1
      %s144 = scalar_select %p141, %s142, %s143
      %p147 = pneg %p141
      %p148 = scmp.eq.s32.totalorder %s16, 1
      %p149 = por %p147, %p148
      %p150 = scmp.ne.s32.totalorder %s142, %s145
      %p151 = scmp.eq.s32.totalorder %s16, 0
      %p152 = por %p150, %p151
      %p153 = scmp.ne.s32.totalorder %s142, %s145
      %p154 = scmp.eq.s32.totalorder %s21, 1
      %p155 = por %p153, %p154
      %p156 = scmp.ne.s32.totalorder %s145, %s146
      %p157 = scmp.eq.s32.totalorder %s21, 0
      %p158 = por %p156, %p157
      %p159 = scmp.ne.s32.totalorder %s145, %s146
      %p160 = scmp.eq.s32.totalorder %s22, 1
      %p161 = por %p159, %p160
      %p163 = scmp.ne.s32.totalorder %s146, %s162
      %p164 = scmp.eq.s32.totalorder %s22, 0
      %p165 = por %p163, %p164
      %s167 = sadd.s32 %s166, 1
      %p170 = scmp.eq.s32.totalorder %s16, 1
      %p171 = scmp.ne.s32.totalorder %s166, %s168
      %p172 = scmp.eq.s32.totalorder %s16, 0
      %p173 = por %p171, %p172
      %p174 = scmp.ne.s32.totalorder %s166, %s168
      %p175 = scmp.eq.s32.totalorder %s21, 1
      %p176 = por %p174, %p175
      %p177 = scmp.ne.s32.totalorder %s168, %s169
      %p178 = scmp.eq.s32.totalorder %s21, 0
      %p179 = por %p177, %p178
      %p180 = scmp.ne.s32.totalorder %s168, %s169
      %p181 = scmp.eq.s32.totalorder %s22, 1
      %p182 = por %p180, %p181
      %p184 = scmp.ne.s32.totalorder %s169, %s183
      %p185 = scmp.eq.s32.totalorder %s22, 0
      %p186 = por %p184, %p185
      %s188 = sadd.s32 %s187, 1
      %p191 = scmp.eq.s32.totalorder %s16, 1
      %p192 = scmp.ne.s32.totalorder %s187, %s189
      %p193 = scmp.eq.s32.totalorder %s16, 0
      %p194 = por %p192, %p193
      %p195 = scmp.ne.s32.totalorder %s187, %s189
      %p196 = scmp.eq.s32.totalorder %s21, 1
      %p197 = por %p195, %p196
      %p198 = scmp.ne.s32.totalorder %s189, %s190
      %p199 = scmp.eq.s32.totalorder %s21, 0
      %p200 = por %p198, %p199
      %p201 = scmp.ne.s32.totalorder %s189, %s190
      %p202 = scmp.eq.s32.totalorder %s22, 1
      %p203 = por %p201, %p202
      %p205 = scmp.ne.s32.totalorder %s190, %s204
      %p206 = scmp.eq.s32.totalorder %s22, 0
      %p207 = por %p205, %p206
      %s209 = sadd.s32 %s208, 1
      %p212 = scmp.eq.s32.totalorder %s16, 1
      %p213 = scmp.ne.s32.totalorder %s208, %s210
      %p214 = scmp.eq.s32.totalorder %s16, 0
      %p215 = por %p213, %p214
      %p216 = scmp.ne.s32.totalorder %s208, %s210
      %p217 = scmp.eq.s32.totalorder %s21, 1
      %p218 = por %p216, %p217
      %p219 = scmp.ne.s32.totalorder %s210, %s211
      %p220 = scmp.eq.s32.totalorder %s21, 0
      %p221 = por %p219, %p220
      %p222 = scmp.ne.s32.totalorder %s210, %s211
      %p223 = scmp.eq.s32.totalorder %s22, 1
      %p224 = por %p222, %p223
      %p226 = scmp.ne.s32.totalorder %s211, %s225
      %p227 = scmp.eq.s32.totalorder %s22, 0
      %p228 = por %p226, %p227
      %s230 = sadd.s32 %s229, 1
      %p233 = scmp.eq.s32.totalorder %s16, 1
      %p234 = scmp.ne.s32.totalorder %s229, %s231
      %p235 = scmp.eq.s32.totalorder %s16, 0
      %p236 = por %p234, %p235
      %p237 = scmp.ne.s32.totalorder %s229, %s231
      %p238 = scmp.eq.s32.totalorder %s21, 1
      %p239 = por %p237, %p238
      %p240 = scmp.ne.s32.totalorder %s231, %s232
      %p241 = scmp.eq.s32.totalorder %s21, 0
      %p242 = por %p240, %p241
      %p243 = scmp.ne.s32.totalorder %s231, %s232
      %p244 = scmp.eq.s32.totalorder %s22, 1
      %p245 = por %p243, %p244
      %p247 = scmp.ne.s32.totalorder %s232, %s246
      %p248 = scmp.eq.s32.totalorder %s22, 0
      %p249 = por %p247, %p248
      %s250 = ssub.s32 %s24, %s31
      %p251 = scmp.eq.s32.totalorder %s250, 0
      %s253 = sadd.s32 %s252, 1
      %s254 = scalar_select %p251, %s252, %s253
      %p257 = pneg %p251
      %p258 = scmp.eq.s32.totalorder %s16, 1
      %p259 = por %p257, %p258
      %p260 = scmp.ne.s32.totalorder %s252, %s255
      %p261 = scmp.eq.s32.totalorder %s16, 0
      %p262 = por %p260, %p261
      %p263 = scmp.ne.s32.totalorder %s252, %s255
      %p264 = scmp.eq.s32.totalorder %s21, 1
      %p265 = por %p263, %p264
      %p266 = scmp.ne.s32.totalorder %s255, %s256
      %p267 = scmp.eq.s32.totalorder %s21, 0
      %p268 = por %p266, %p267
      %p269 = scmp.ne.s32.totalorder %s255, %s256
      %p270 = scmp.eq.s32.totalorder %s22, 1
      %p271 = por %p269, %p270
      %p273 = scmp.ne.s32.totalorder %s256, %s272
      %p274 = scmp.eq.s32.totalorder %s22, 0
      %p275 = por %p273, %p274
      %s276 = ssub.s32 %s23, %s35
      %p277 = scmp.eq.s32.totalorder %s276, 0
      %s279 = sadd.s32 %s278, 1
      %s280 = scalar_select %p277, %s278, %s279
      %p283 = pneg %p277
      %p284 = scmp.eq.s32.totalorder %s16, 1
      %p285 = por %p283, %p284
      %p286 = scmp.ne.s32.totalorder %s278, %s281
      %p287 = scmp.eq.s32.totalorder %s16, 0
      %p288 = por %p286, %p287
      %p289 = scmp.ne.s32.totalorder %s278, %s281
      %p290 = scmp.eq.s32.totalorder %s21, 1
      %p291 = por %p289, %p290
      %p292 = scmp.ne.s32.totalorder %s281, %s282
      %p293 = scmp.eq.s32.totalorder %s21, 0
      %p294 = por %p292, %p293
      %p295 = scmp.ne.s32.totalorder %s281, %s282
      %p296 = scmp.eq.s32.totalorder %s22, 1
      %p297 = por %p295, %p296
      %p299 = scmp.ne.s32.totalorder %s282, %s298
      %p300 = scmp.eq.s32.totalorder %s22, 0
      %p301 = por %p299, %p300
      %p302 = scmp.le.s32.totalorder 1, %s16
      %p303 = scmp.lt.s32.totalorder %s16, 3
      %p304 = pnand %p302, %p303
      %p305 = pneg %p304
      // Predicated region
      $region9: #{tpu_custom_call.1} parent=5 // pred_check
        _
      $region10: #{tpu_custom_call.1} parent=5 // pred_check_branch
        %307 = sbr.rel (%p304) target = $region12
      $region11: #{tpu_custom_call.1} parent=5 // pred_region
        %s308 = ssub.s32 %s16, 1
        // Predicated region
        $region13: #{tpu_custom_call.1} parent=11 // pred_check
          %p309 = pneg %p54
        $region14: #{tpu_custom_call.1} parent=11 // pred_check_branch
          %311 = sbr.rel (%p309) target = $region16
        $region15: #{tpu_custom_call.1} parent=11 // pred_region
          %s312 = smul.u32 8, %s25
          %p313 = scmp.lt.s32.totalorder %s312, 7
          %s314 = scalar_select %p313, %s312, 7
          %s315 = smul.addr %s314, 4
          %s316 = scalar_lea.vmem %s0, %s315
          %s317 = smul.u32 8, %s25
        $region16: #{tpu_custom_call.1} parent=11 // pred_fallthru
          _
        // Predicated region
        $region17: #{tpu_custom_call.1} parent=11 // pred_check
          %p318 = pneg %p80
        $region18: #{tpu_custom_call.1} parent=11 // pred_check_branch
          %320 = sbr.rel (%p318) target = $region20
        $region19: #{tpu_custom_call.1} parent=11 // pred_region
          %s321 = smul.u32 8, %s25
          %p322 = scmp.lt.s32.totalorder %s321, 7
          %s323 = scalar_select %p322, %s321, 7
          %s324 = smul.addr %s323, 4
          %s325 = scalar_lea.vmem %s1, %s324
          %s326 = smul.u32 8, %s25
        $region20: #{tpu_custom_call.1} parent=11 // pred_fallthru
          _
        // Predicated region
        $region21: #{tpu_custom_call.1} parent=11 // pred_check
          %p327 = pneg %p106
        $region22: #{tpu_custom_call.1} parent=11 // pred_check_branch
          %329 = sbr.rel (%p327) target = $region24
        $region23: #{tpu_custom_call.1} parent=11 // pred_region
          %s330 = smul.u32 8, %s25
          %p331 = scmp.lt.s32.totalorder %s330, 7
          %s332 = scalar_select %p331, %s330, 7
          %s333 = smul.addr %s332, 8
          %s334 = scalar_lea.vmem %s2, %s333
          %s335 = smul.u32 8, %s25
        $region24: #{tpu_custom_call.1} parent=11 // pred_fallthru
          _
        // Predicated region
        $region25: #{tpu_custom_call.1} parent=11 // pred_check
          %p336 = pneg %p132
        $region26: #{tpu_custom_call.1} parent=11 // pred_check_branch
          %338 = sbr.rel (%p336) target = $region28
        $region27: #{tpu_custom_call.1} parent=11 // pred_region
          %s339 = smul.u32 8, %s25
          %p340 = scmp.lt.s32.totalorder %s339, 7
          %s341 = scalar_select %p340, %s339, 7
          %s342 = smul.addr %s341, 8
          %s343 = scalar_lea.vmem %s3, %s342
          %s344 = smul.u32 8, %s25
        $region28: #{tpu_custom_call.1} parent=11 // pred_fallthru
          _
        // Predicated region
        $region29: #{tpu_custom_call.1} parent=11 // pred_check
          %p345 = pneg %p158
        $region30: #{tpu_custom_call.1} parent=11 // pred_check_branch
          %347 = sbr.rel (%p345) target = $region32
        $region31: #{tpu_custom_call.1} parent=11 // pred_region
          %s348 = smul.u32 8, %s25
          %p349 = scmp.lt.s32.totalorder %s348, 7
          %s350 = scalar_select %p349, %s348, 7
          %s351 = smul.addr %s350, 4
          %s352 = scalar_lea.vmem %s4, %s351
          %s353 = smul.u32 8, %s25
        $region32: #{tpu_custom_call.1} parent=11 // pred_fallthru
          _
        // Predicated region
        $region33: #{tpu_custom_call.1} parent=11 // pred_check
          %p354 = pneg %p179
        $region34: #{tpu_custom_call.1} parent=11 // pred_check_branch
          %356 = sbr.rel (%p354) target = $region36
        $region35: #{tpu_custom_call.1} parent=11 // pred_region
          _
        $region36: #{tpu_custom_call.1} parent=11 // pred_fallthru
          _
        // Predicated region
        $region37: #{tpu_custom_call.1} parent=11 // pred_check
          %p357 = pneg %p200
        $region38: #{tpu_custom_call.1} parent=11 // pred_check_branch
          %359 = sbr.rel (%p357) target = $region40
        $region39: #{tpu_custom_call.1} parent=11 // pred_region
          _
        $region40: #{tpu_custom_call.1} parent=11 // pred_fallthru
          _
        // Predicated region
        $region41: #{tpu_custom_call.1} parent=11 // pred_check
          %p360 = pneg %p221
        $region42: #{tpu_custom_call.1} parent=11 // pred_check_branch
          %362 = sbr.rel (%p360) target = $region44
        $region43: #{tpu_custom_call.1} parent=11 // pred_region
          _
        $region44: #{tpu_custom_call.1} parent=11 // pred_fallthru
          _
        // Predicated region
        $region45: #{tpu_custom_call.1} parent=11 // pred_check
          %p363 = pneg %p242
        $region46: #{tpu_custom_call.1} parent=11 // pred_check_branch
          %365 = sbr.rel (%p363) target = $region48
        $region47: #{tpu_custom_call.1} parent=11 // pred_region
          _
        $region48: #{tpu_custom_call.1} parent=11 // pred_fallthru
          _
      $region12: #{tpu_custom_call.1} parent=5 // pred_fallthru
        _
      %p366 = scmp.lt.s32.totalorder %s16, 2
      // Predicated region
      $region49: #{tpu_custom_call.1} parent=5 // pred_check
        %p367 = pneg %p366
      $region50: #{tpu_custom_call.1} parent=5 // pred_check_branch
        %369 = sbr.rel (%p367) target = $region52
      $region51: #{tpu_custom_call.1} parent=5 // pred_region
        // Predicated region
        $region53: #{tpu_custom_call.1} parent=51 // pred_check
          %p370 = pneg %p262
        $region54: #{tpu_custom_call.1} parent=51 // pred_check_branch
          %372 = sbr.rel (%p370) target = $region56
        $region55: #{tpu_custom_call.1} parent=51 // pred_region
          %s373 = sand.u32 %s252, 1
          %s374 = sand.u32 %s252, 1
          %s375 = smul.addr %s374, 16
          %s376 = scalar_lea.vmem [#allocation6], %s375
          %s377 = smul.addr %s24, 4
          %s378 = scalar_lea.vmem %s9, %s377
          // Predicated region
          $region57: #{tpu_custom_call.1} parent=55 // pred_check
            _
          $region58: #{tpu_custom_call.1} parent=55 // pred_check_branch
            %380 = sbr.rel (0) target = $region60
          $region59: #{tpu_custom_call.1} parent=55 // pred_region
            // Predicated region
            $region61: #{tpu_custom_call.1} parent=59 // pred_check
              _
            $region62: #{tpu_custom_call.1} parent=59 // pred_check_branch
              %382 = sbr.rel target = $region64
            $region63: #{tpu_custom_call.1} parent=59 // pred_region
              // Predicated region
              $region76: #{tpu_custom_call.1} parent=63 // pred_check
                _
              $region77: #{tpu_custom_call.1} parent=63 // pred_check_branch
                %403 = sbr.rel (0) target = $region79
              $region78: #{tpu_custom_call.1} parent=63 // pred_region
                loop: start=0, step=1, limit=1
                $region80: #{tpu_custom_call.1} parent=78 // loop_pre_header
                  _
                $region81: #{tpu_custom_call.1} parent=78 // loop_header
                  %s405 = sphi 0, %s409
                  %p406 = scmp.ge.s32.totalorder %s405, 1
                  %s410 = sphi %s378, %s378
                  %s411 = sphi %s376, %s376
                $region82: #{tpu_custom_call.1} parent=78 // loop_header_branch
                  %408 = sbr.rel (%p406) target = $region86
                $region83: #{tpu_custom_call.1} parent=78 // loop_body
                  _
                $region84: #{tpu_custom_call.1} parent=78 // loop_footer
                  %s409 = sadd.s32 1, %s405
                $region85: #{tpu_custom_call.1} parent=78 // loop_footer_branch
                  %404 = sbr.rel target = $region81
                $region86: #{tpu_custom_call.1} parent=78 // loop_exit
                  _
                loop: start=0, step=1, limit=1
                $region87: #{tpu_custom_call.1} parent=78 // loop_pre_header
                  _
                $region88: #{tpu_custom_call.1} parent=78 // loop_header
                  %s414 = sphi 0, %s418
                  %p415 = scmp.ge.s32.totalorder %s414, 1
                  %s419 = sphi %s378, %s378
                  %s420 = sphi %s376, %s376
                $region89: #{tpu_custom_call.1} parent=78 // loop_header_branch
                  %417 = sbr.rel (%p415) target = $region93
                $region90: #{tpu_custom_call.1} parent=78 // loop_body
                  %v421 = vld [vmem:[%s419] sm:$0xf]
                  %422 = vst [vmem:[%s420] sm:$0xf] %v421
                  %v423 = vld [vmem:[%s419 + $0x8] sm:$0xf]
                  %424 = vst [vmem:[%s420 + $0x4] sm:$0xf] %v423
                  %v425 = vld [vmem:[%s419 + $0x10] sm:$0xf]
                  %426 = vst [vmem:[%s420 + $0x8] sm:$0xf] %v425
                  %v427 = vld [vmem:[%s419 + $0x18] sm:$0xf]
                  %428 = vst [vmem:[%s420 + $0xc] sm:$0xf] %v427
                $region91: #{tpu_custom_call.1} parent=78 // loop_footer
                  %s418 = sadd.s32 1, %s414
                $region92: #{tpu_custom_call.1} parent=78 // loop_footer_branch
                  %413 = sbr.rel target = $region88
                $region93: #{tpu_custom_call.1} parent=78 // loop_exit
                  _
              $region79: #{tpu_custom_call.1} parent=63 // pred_fallthru
                _
            $region64: #{tpu_custom_call.1} parent=59 // pred_fallthru
              _
            // Predicated region
            $region65: #{tpu_custom_call.1} parent=59 // pred_check
              _
            $region66: #{tpu_custom_call.1} parent=59 // pred_check_branch
              %384 = sbr.rel (0) target = $region68
            $region67: #{tpu_custom_call.1} parent=59 // pred_region
              loop: start=0, step=1, limit=1
              $region69: #{tpu_custom_call.1} parent=67 // loop_pre_header
                _
              $region70: #{tpu_custom_call.1} parent=67 // loop_header
                %s387 = sphi 0, %s391
                %p388 = scmp.ge.s32.totalorder %s387, 1
                %s392 = sphi %s378, %s378
                %s393 = sphi %s376, %s376
              $region71: #{tpu_custom_call.1} parent=67 // loop_header_branch
                %390 = sbr.rel (%p388) target = $region75
              $region72: #{tpu_custom_call.1} parent=67 // loop_body
                %v394 = vld [vmem:[%s392] sm:$0xf]
                %395 = vst [vmem:[%s393] sm:$0xf] %v394
                %v396 = vld [vmem:[%s392 + $0x8] sm:$0xf]
                %397 = vst [vmem:[%s393 + $0x4] sm:$0xf] %v396
                %v398 = vld [vmem:[%s392 + $0x10] sm:$0xf]
                %399 = vst [vmem:[%s393 + $0x8] sm:$0xf] %v398
                %v400 = vld [vmem:[%s392 + $0x18] sm:$0xf]
                %401 = vst [vmem:[%s393 + $0xc] sm:$0xf] %v400
              $region73: #{tpu_custom_call.1} parent=67 // loop_footer
                %s391 = sadd.s32 1, %s387
              $region74: #{tpu_custom_call.1} parent=67 // loop_footer_branch
                %386 = sbr.rel target = $region70
              $region75: #{tpu_custom_call.1} parent=67 // loop_exit
                _
            $region68: #{tpu_custom_call.1} parent=59 // pred_fallthru
              _
          $region60: #{tpu_custom_call.1} parent=55 // pred_fallthru
            _
          %429 = vnop
        $region56: #{tpu_custom_call.1} parent=51 // pred_fallthru
          _
      $region52: #{tpu_custom_call.1} parent=5 // pred_fallthru
        _
      %p430 = scmp.le.s32.totalorder 1, %s16
      %p431 = scmp.lt.s32.totalorder %s16, 3
      %p432 = pnand %p430, %p431
      %p433 = pneg %p432
      // Predicated region
      $region94: #{tpu_custom_call.1} parent=5 // pred_check
        _
      $region95: #{tpu_custom_call.1} parent=5 // pred_check_branch
        %435 = sbr.rel (%p432) target = $region97
      $region96: #{tpu_custom_call.1} parent=5 // pred_region
        %s436 = ssub.s32 %s16, 1
        %s437 = sand.u32 %s255, 1
        %s438 = sand.u32 %s255, 1
        %s439 = smul.addr %s438, 16
        %s440 = scalar_lea.vmem [#allocation6], %s439
        // Predicated region
        $region98: #{tpu_custom_call.1} parent=96 // pred_check
          %p441 = pneg %p268
        $region99: #{tpu_custom_call.1} parent=96 // pred_check_branch
          %443 = sbr.rel (%p441) target = $region101
        $region100: #{tpu_custom_call.1} parent=96 // pred_region
          _
        $region101: #{tpu_custom_call.1} parent=96 // pred_fallthru
          _
        %s444 = smul.u32 8, %s25
        %p445 = scmp.lt.s32.totalorder %s444, 7
        %s446 = scalar_select %p445, %s444, 7
        %s447 = smul.addr %s446, 4
        %s448 = scalar_lea.vmem %s0, %s447
        %p449 = pneg %p54
        %p450 = pneg %p51
        %s451 = smul.u32 8, %s25
        %p452 = scmp.lt.s32.totalorder %s451, 7
        %s453 = scalar_select %p452, %s451, 7
        %s454 = smul.addr %s453, 4
        %s455 = scalar_lea.vmem %s1, %s454
        %p456 = pneg %p80
        %p457 = pneg %p77
        %s458 = smul.u32 8, %s25
        %p459 = scmp.lt.s32.totalorder %s458, 7
        %s460 = scalar_select %p459, %s458, 7
        %s461 = smul.addr %s460, 8
        %s462 = scalar_lea.vmem %s2, %s461
        %p463 = pneg %p106
        %p464 = pneg %p103
        %s465 = smul.u32 8, %s25
        %p466 = scmp.lt.s32.totalorder %s465, 7
        %s467 = scalar_select %p466, %s465, 7
        %s468 = smul.addr %s467, 8
        %s469 = scalar_lea.vmem %s3, %s468
        %p470 = pneg %p132
        %p471 = pneg %p129
        %s472 = smul.u32 8, %s25
        %p473 = scmp.lt.s32.totalorder %s472, 7
        %s474 = scalar_select %p473, %s472, 7
        %s475 = smul.addr %s474, 4
        %s476 = scalar_lea.vmem %s4, %s475
        %p477 = pneg %p158
        %p478 = pneg %p155
        %p479 = pneg %p179
        %p480 = pneg %p176
        %p481 = pneg %p200
        %p482 = pneg %p197
        %p483 = pneg %p221
        %p484 = pneg %p218
        %p485 = pneg %p242
        %p486 = pneg %p239
        %s487 = sand.u32 %s255, 1
        %s488 = sand.u32 %s255, 1
        %s489 = smul.addr %s488, 16
        %s490 = scalar_lea.vmem [#allocation6], %s489
        %p491 = pneg %p268
        %p492 = pneg %p265
        %p493 = pneg %p294
        %p494 = pneg %p291
        %p495 = scmp.lt.s32.totalorder %s25, 0
        %s496 = scalar_select %p495, %s25, 0
        %s497 = smul.addr %s496, 8
        %s498 = scalar_lea.vmem %s10, %s497
        %s499 = smul.u32 8, %s25
        %p500 = scmp.lt.s32.totalorder %s499, 7
        %s501 = scalar_select %p500, %s499, 7
        %s502 = smul.addr %s501, 4
        %s503 = scalar_lea.vmem %s0, %s502
        %s504 = smul.u32 8, %s25
        %s505 = smul.u32 8, %s25
        %p506 = scmp.lt.s32.totalorder %s505, 7
        %s507 = scalar_select %p506, %s505, 7
        %s508 = smul.addr %s507, 4
        %s509 = scalar_lea.vmem %s1, %s508
        %s510 = smul.u32 8, %s25
        %s511 = smul.u32 8, %s25
        %p512 = scmp.lt.s32.totalorder %s511, 7
        %s513 = scalar_select %p512, %s511, 7
        %s514 = smul.addr %s513, 8
        %s515 = scalar_lea.vmem %s2, %s514
        %s516 = smul.u32 8, %s25
        %s517 = smul.u32 8, %s25
        %p518 = scmp.lt.s32.totalorder %s517, 7
        %s519 = scalar_select %p518, %s517, 7
        %s520 = smul.addr %s519, 8
        %s521 = scalar_lea.vmem %s3, %s520
        %s522 = smul.u32 8, %s25
        %s523 = smul.u32 8, %s25
        %p524 = scmp.lt.s32.totalorder %s523, 7
        %s525 = scalar_select %p524, %s523, 7
        %s526 = smul.addr %s525, 4
        %s527 = scalar_lea.vmem %s4, %s526
        %s528 = smul.u32 8, %s25
        %p529 = scmp.lt.s32.totalorder %s25, 0
        %s530 = scalar_select %p529, %s25, 0
        %s531 = smul.addr %s530, 8
        %s532 = scalar_lea.vmem %s10, %s531
        %p534 = scmp.eq.s32.totalorder %s26, 0
        // Predicated region
        $region102: #{tpu_custom_call.1} parent=96 // pred_check
          %p535 = pneg %p534
        $region103: #{tpu_custom_call.1} parent=96 // pred_check_branch
          %537 = sbr.rel (%p535) target = $region105
        $region104: #{tpu_custom_call.1} parent=96 // pred_region
          %v538 = vld [vmem:[%s503] sm:$0xf]
          %v539 = vld [vmem:[%s503 + $0x4] sm:$0xf]
          %v540 = vld [vmem:[%s503 + $0x8] sm:$0xf]
          %v541 = vld [vmem:[%s503 + $0xc] sm:$0xf]
          %v542 = vld [vmem:[%s503 + $0x10] sm:$0xf]
          %v543 = vld [vmem:[%s503 + $0x14] sm:$0xf]
          %v544 = vld [vmem:[%s503 + $0x18] sm:$0xf]
          %v545 = vld [vmem:[%s503 + $0x1c] sm:$0xf]
          %v546 = vld [vmem:[%s5] sm:$0xf]
          %v547 = vld [vmem:[%s5 + $0x4] sm:$0xf]
          %v548 = vld [vmem:[%s5 + $0x8] sm:$0xf]
          %v549 = vld [vmem:[%s5 + $0xc] sm:$0xf]
          %v550 = vld [vmem:[%s6] sm:$0x1]
          %v552 = vlaneseq
          %v553 = vshrl.u32 %v552, 7
          %v554 = vsub.s32 0, %v553
          %v555 = vrot.slane %v550, %v554
          %v565 = vunpack.c.l.b16 %v538
          %v566 = vunpack.c.l.b16 %v539
          %v567 = vunpack.c.l.b16 %v540
          %v568 = vunpack.c.l.b16 %v541
          %v569 = vunpack.c.l.b16 %v542
          %v570 = vunpack.c.l.b16 %v543
          %v571 = vunpack.c.l.b16 %v544
          %v572 = vunpack.c.l.b16 %v545
          %v573 = vpack.c.b16 %v566, %v565
          %v574 = vpack.c.b16 %v568, %v567
          %v575 = vpack.c.b16 %v570, %v569
          %v576 = vpack.c.b16 %v572, %v571
          %v581 = vunpack.c.l.b16 %v546
          %v582 = vunpack.c.l.b16 %v547
          %v583 = vunpack.c.l.b16 %v548
          %v584 = vunpack.c.l.b16 %v549
          %v585 = vpack.c.b16 %v582, %v581
          %v586 = vpack.c.b16 %v584, %v583
          %vm589 = vcmask 261120
          %v591 = vsel %vm589, %v573, 0
          %v594 = vsel %vm589, %v574, 0
          %v597 = vsel %vm589, %v575, 0
          %v600 = vsel %vm589, %v576, 0
          %602 = vmatprep.subr.bf16.mxu0 0
          %603 = vmatpush1.bf16.msra.mxu0 %v585
          %604 = vmatprep.subr.bf16.mxu0 0
          %605 = vmatpush1.bf16.msra.mxu0 %v586
          %606 = vmatprep.subr.bf16.mxu0 0
          %607 = vmatpush1.bf16.msra.mxu0 0
          %608 = vmatprep.subr.bf16.mxu0 0
          %609 = vmatpush1.bf16.msra.mxu0 0
          %610 = vmatprep.subr.bf16.mxu0 0
          %611 = vmatpush1.bf16.msra.mxu0 0
          %612 = vmatprep.subr.bf16.mxu0 0
          %613 = vmatpush1.bf16.msra.mxu0 0
          %614 = vmatprep.subr.bf16.mxu0 0
          %615 = vmatpush1.bf16.msra.mxu0 0
          %616 = vmatprep.subr.bf16.mxu0 0
          %617 = vmatpush1.bf16.msra.mxu0 0
          %618 = vmatprep.subr.bf16.mxu0 0
          %619 = vmatpush1.bf16.msra.mxu0 0
          %620 = vmatprep.subr.bf16.mxu0 0
          %621 = vmatpush1.bf16.msra.mxu0 0
          %622 = vmatprep.subr.bf16.mxu0 0
          %623 = vmatpush1.bf16.msra.mxu0 0
          %624 = vmatprep.subr.bf16.mxu0 0
          %625 = vmatpush1.bf16.msra.mxu0 0
          %626 = vmatprep.subr.bf16.mxu0 0
          %627 = vmatpush1.bf16.msra.mxu0 0
          %628 = vmatprep.subr.bf16.mxu0 0
          %629 = vmatpush1.bf16.msra.mxu0 0
          %630 = vmatprep.subr.bf16.mxu0 0
          %631 = vmatpush1.bf16.msra.mxu0 0
          %632 = vmatprep.subr.bf16.mxu0 0
          %633 = vmatpush1.bf16.msra.mxu0 0
          %634 = vmatprep.mubr.bf16.mxu0 0
          %635 = vmatmul.mubr.bf16.gmra.mrb[0].mxu0 %v591
          %v636 = vpop.f32.mrb[0].mxu0
          %v637 = vadd.f32 %v555, %v636
          %v638 = vpop.f32.mrb[0].mxu0
          %v639 = vpop.f32.mrb[0].mxu0
          %v640 = vadd.f32 %v555, %v639
          %v641 = vpop.f32.mrb[0].mxu0
          %642 = vmatprep.mubr.bf16.mxu0 0
          %643 = vmatmul.mubr.bf16.gmra.mrb[0].mxu0 %v594
          %v644 = vpop.f32.mrb[0].mxu0
          %v645 = vadd.f32 %v555, %v644
          %v646 = vpop.f32.mrb[0].mxu0
          %v647 = vpop.f32.mrb[0].mxu0
          %v648 = vadd.f32 %v555, %v647
          %v649 = vpop.f32.mrb[0].mxu0
          %650 = vmatprep.mubr.bf16.mxu0 0
          %651 = vmatmul.mubr.bf16.gmra.mrb[0].mxu0 %v597
          %v652 = vpop.f32.mrb[0].mxu0
          %v653 = vadd.f32 %v555, %v652
          %v654 = vpop.f32.mrb[0].mxu0
          %v655 = vpop.f32.mrb[0].mxu0
          %v656 = vadd.f32 %v555, %v655
          %v657 = vpop.f32.mrb[0].mxu0
          %658 = vmatprep.mubr.bf16.mxu0 0
          %659 = vmatmul.mubr.bf16.gmra.mrb[0].mxu0 %v600
          %v660 = vpop.f32.mrb[0].mxu0
          %v661 = vadd.f32 %v555, %v660
          %v662 = vpop.f32.mrb[0].mxu0
          %v663 = vpop.f32.mrb[0].mxu0
          %v664 = vadd.f32 %v555, %v663
          %v665 = vpop.f32.mrb[0].mxu0
          %666 = vdwg.mxu0
          %v667 = vtanh.pop %v637
          %v668 = vtanh.pop %v640
          %v669 = vtanh.pop %v645
          %v670 = vtanh.pop %v648
          %v671 = vtanh.pop %v653
          %v672 = vtanh.pop %v656
          %v673 = vtanh.pop %v661
          %v674 = vtanh.pop %v664
          %v675 = vld [vmem:[%s515] sm:$0xff]
          %v676 = vld [vmem:[%s515 + $0x8] sm:$0xff]
          %v677 = vld [vmem:[%s515 + $0x10] sm:$0xff]
          %v678 = vld [vmem:[%s515 + $0x18] sm:$0xff]
          %v679 = vld [vmem:[%s515 + $0x20] sm:$0xff]
          %v680 = vld [vmem:[%s515 + $0x28] sm:$0xff]
          %v681 = vld [vmem:[%s515 + $0x30] sm:$0xff]
          %v682 = vld [vmem:[%s515 + $0x38] sm:$0xff]
          %684 = vset.pattern.permute.xlu0 0
          %685 = vperm.xlu0 %684, %v675
          %v686 = vpop.permute.xlu0 %685
          %689 = vset.pattern.permute.xlu0 0
          %690 = vperm.xlu0 %689, %v676
          %v691 = vpop.permute.xlu0 %690
          %694 = vset.pattern.permute.xlu0 0
          %695 = vperm.xlu0 %694, %v677
          %v696 = vpop.permute.xlu0 %695
          %699 = vset.pattern.permute.xlu0 0
          %700 = vperm.xlu0 %699, %v678
          %v701 = vpop.permute.xlu0 %700
          %704 = vset.pattern.permute.xlu0 0
          %705 = vperm.xlu0 %704, %v679
          %v706 = vpop.permute.xlu0 %705
          %709 = vset.pattern.permute.xlu0 0
          %710 = vperm.xlu0 %709, %v680
          %v711 = vpop.permute.xlu0 %710
          %714 = vset.pattern.permute.xlu0 0
          %715 = vperm.xlu0 %714, %v681
          %v716 = vpop.permute.xlu0 %715
          %719 = vset.pattern.permute.xlu0 0
          %720 = vperm.xlu0 %719, %v682
          %v721 = vpop.permute.xlu0 %720
          %v723 = vmul.f32 %v667, %v686
          %v724 = vmul.f32 %v668, %v691
          %v725 = vmul.f32 %v669, %v696
          %v726 = vmul.f32 %v670, %v701
          %v727 = vmul.f32 %v671, %v706
          %v728 = vmul.f32 %v672, %v711
          %v729 = vmul.f32 %v673, %v716
          %v730 = vmul.f32 %v674, %v721
          %v731 = vsel %vm589, %v723, 0.0
          %v732 = vrot.slane %v731, 4
          %v733 = vadd.f32 %v731, %v732
          %v734 = vrot.slane %v733, 2
          %v735 = vadd.f32 %v733, %v734
          %v736 = vrot.slane %v735, 1
          %v737 = vadd.f32 %v735, %v736
          %v738 = vsel %vm589, %v724, 0.0
          %v739 = vrot.slane %v738, 4
          %v740 = vadd.f32 %v738, %v739
          %v741 = vrot.slane %v740, 2
          %v742 = vadd.f32 %v740, %v741
          %v743 = vrot.slane %v742, 1
          %v744 = vadd.f32 %v742, %v743
          %v745 = vsel %vm589, %v725, 0.0
          %v746 = vrot.slane %v745, 4
          %v747 = vadd.f32 %v745, %v746
          %v748 = vrot.slane %v747, 2
          %v749 = vadd.f32 %v747, %v748
          %v750 = vrot.slane %v749, 1
          %v751 = vadd.f32 %v749, %v750
          %v752 = vsel %vm589, %v726, 0.0
          %v753 = vrot.slane %v752, 4
          %v754 = vadd.f32 %v752, %v753
          %v755 = vrot.slane %v754, 2
          %v756 = vadd.f32 %v754, %v755
          %v757 = vrot.slane %v756, 1
          %v758 = vadd.f32 %v756, %v757
          %v759 = vsel %vm589, %v727, 0.0
          %v760 = vrot.slane %v759, 4
          %v761 = vadd.f32 %v759, %v760
          %v762 = vrot.slane %v761, 2
          %v763 = vadd.f32 %v761, %v762
          %v764 = vrot.slane %v763, 1
          %v765 = vadd.f32 %v763, %v764
          %v766 = vsel %vm589, %v728, 0.0
          %v767 = vrot.slane %v766, 4
          %v768 = vadd.f32 %v766, %v767
          %v769 = vrot.slane %v768, 2
          %v770 = vadd.f32 %v768, %v769
          %v771 = vrot.slane %v770, 1
          %v772 = vadd.f32 %v770, %v771
          %v773 = vsel %vm589, %v729, 0.0
          %v774 = vrot.slane %v773, 4
          %v775 = vadd.f32 %v773, %v774
          %v776 = vrot.slane %v775, 2
          %v777 = vadd.f32 %v775, %v776
          %v778 = vrot.slane %v777, 1
          %v779 = vadd.f32 %v777, %v778
          %v780 = vsel %vm589, %v730, 0.0
          %v781 = vrot.slane %v780, 4
          %v782 = vadd.f32 %v780, %v781
          %v783 = vrot.slane %v782, 2
          %v784 = vadd.f32 %v782, %v783
          %v785 = vrot.slane %v784, 1
          %v786 = vadd.f32 %v784, %v785
          %vm787 = vcmask 7168
          %v788 = vsel %vm787, %v675, 0.0
          %v789 = vrot.slane %v788, 4
          %v790 = vadd.f32 %v788, %v789
          %v791 = vrot.slane %v790, 2
          %v792 = vadd.f32 %v790, %v791
          %v793 = vrot.slane %v792, 1
          %v794 = vadd.f32 %v792, %v793
          %v795 = vsel %vm787, %v676, 0.0
          %v796 = vrot.slane %v795, 4
          %v797 = vadd.f32 %v795, %v796
          %v798 = vrot.slane %v797, 2
          %v799 = vadd.f32 %v797, %v798
          %v800 = vrot.slane %v799, 1
          %v801 = vadd.f32 %v799, %v800
          %v802 = vsel %vm787, %v677, 0.0
          %v803 = vrot.slane %v802, 4
          %v804 = vadd.f32 %v802, %v803
          %v805 = vrot.slane %v804, 2
          %v806 = vadd.f32 %v804, %v805
          %v807 = vrot.slane %v806, 1
          %v808 = vadd.f32 %v806, %v807
          %v809 = vsel %vm787, %v678, 0.0
          %v810 = vrot.slane %v809, 4
          %v811 = vadd.f32 %v809, %v810
          %v812 = vrot.slane %v811, 2
          %v813 = vadd.f32 %v811, %v812
          %v814 = vrot.slane %v813, 1
          %v815 = vadd.f32 %v813, %v814
          %v816 = vsel %vm787, %v679, 0.0
          %v817 = vrot.slane %v816, 4
          %v818 = vadd.f32 %v816, %v817
          %v819 = vrot.slane %v818, 2
          %v820 = vadd.f32 %v818, %v819
          %v821 = vrot.slane %v820, 1
          %v822 = vadd.f32 %v820, %v821
          %v823 = vsel %vm787, %v680, 0.0
          %v824 = vrot.slane %v823, 4
          %v825 = vadd.f32 %v823, %v824
          %v826 = vrot.slane %v825, 2
          %v827 = vadd.f32 %v825, %v826
          %v828 = vrot.slane %v827, 1
          %v829 = vadd.f32 %v827, %v828
          %v830 = vsel %vm787, %v681, 0.0
          %v831 = vrot.slane %v830, 4
          %v832 = vadd.f32 %v830, %v831
          %v833 = vrot.slane %v832, 2
          %v834 = vadd.f32 %v832, %v833
          %v835 = vrot.slane %v834, 1
          %v836 = vadd.f32 %v834, %v835
          %v837 = vsel %vm787, %v682, 0.0
          %v838 = vrot.slane %v837, 4
          %v839 = vadd.f32 %v837, %v838
          %v840 = vrot.slane %v839, 2
          %v841 = vadd.f32 %v839, %v840
          %v842 = vrot.slane %v841, 1
          %v843 = vadd.f32 %v841, %v842
          %v844 = vmax.f32 %v794, 1.0
          %v845 = vmax.f32 %v801, 1.0
          %v846 = vmax.f32 %v808, 1.0
          %v847 = vmax.f32 %v815, 1.0
          %v848 = vmax.f32 %v822, 1.0
          %v849 = vmax.f32 %v829, 1.0
          %v850 = vmax.f32 %v836, 1.0
          %v851 = vmax.f32 %v843, 1.0
          %853 = vset.pattern.permute.xlu0 0
          %854 = vperm.xlu0 %853, %v844
          %v855 = vpop.permute.xlu0 %854
          %858 = vset.pattern.permute.xlu0 0
          %859 = vperm.xlu0 %858, %v845
          %v860 = vpop.permute.xlu0 %859
          %863 = vset.pattern.permute.xlu0 0
          %864 = vperm.xlu0 %863, %v846
          %v865 = vpop.permute.xlu0 %864
          %868 = vset.pattern.permute.xlu0 0
          %869 = vperm.xlu0 %868, %v847
          %v870 = vpop.permute.xlu0 %869
          %873 = vset.pattern.permute.xlu0 0
          %874 = vperm.xlu0 %873, %v848
          %v875 = vpop.permute.xlu0 %874
          %878 = vset.pattern.permute.xlu0 0
          %879 = vperm.xlu0 %878, %v849
          %v880 = vpop.permute.xlu0 %879
          %883 = vset.pattern.permute.xlu0 0
          %884 = vperm.xlu0 %883, %v850
          %v885 = vpop.permute.xlu0 %884
          %888 = vset.pattern.permute.xlu0 0
          %889 = vperm.xlu0 %888, %v851
          %v890 = vpop.permute.xlu0 %889
          %v892 = vrcp.pop %v855
          %v893 = vmul.f32 %v737, %v892
          %v894 = vrcp.pop %v860
          %v895 = vmul.f32 %v744, %v894
          %v896 = vrcp.pop %v865
          %v897 = vmul.f32 %v751, %v896
          %v898 = vrcp.pop %v870
          %v899 = vmul.f32 %v758, %v898
          %v900 = vrcp.pop %v875
          %v901 = vmul.f32 %v765, %v900
          %v902 = vrcp.pop %v880
          %v903 = vmul.f32 %v772, %v902
          %v904 = vrcp.pop %v885
          %v905 = vmul.f32 %v779, %v904
          %v906 = vrcp.pop %v890
          %v907 = vmul.f32 %v786, %v906
          %v908 = vld [vmem:[%s509] sm:$0xf]
          %v909 = vld [vmem:[%s509 + $0x4] sm:$0xf]
          %v910 = vld [vmem:[%s509 + $0x8] sm:$0xf]
          %v911 = vld [vmem:[%s509 + $0xc] sm:$0xf]
          %v912 = vld [vmem:[%s509 + $0x10] sm:$0xf]
          %v913 = vld [vmem:[%s509 + $0x14] sm:$0xf]
          %v914 = vld [vmem:[%s509 + $0x18] sm:$0xf]
          %v915 = vld [vmem:[%s509 + $0x1c] sm:$0xf]
          %v916 = vunpack.c.l.bf16 %v908
          %v917 = vunpack.c.l.bf16 %v909
          %v918 = vunpack.c.l.bf16 %v910
          %v919 = vunpack.c.l.bf16 %v911
          %v920 = vunpack.c.l.bf16 %v912
          %v921 = vunpack.c.l.bf16 %v913
          %v922 = vunpack.c.l.bf16 %v914
          %v923 = vunpack.c.l.bf16 %v915
          %v924 = vadd.f32 %v916, %v893
          %v925 = vadd.f32 %v917, %v895
          %v926 = vadd.f32 %v918, %v897
          %v927 = vadd.f32 %v919, %v899
          %v928 = vadd.f32 %v920, %v901
          %v929 = vadd.f32 %v921, %v903
          %v930 = vadd.f32 %v922, %v905
          %v931 = vadd.f32 %v923, %v907
          %v932 = vpack.c.bf16 %v925, %v924
          %v933 = vpack.c.bf16 %v927, %v926
          %v934 = vpack.c.bf16 %v929, %v928
          %v935 = vpack.c.bf16 %v931, %v930
          %v936 = vld [vmem:[%s7] sm:$0xf]
          %v937 = vld [vmem:[%s7 + $0x4] sm:$0xf]
          %v938 = vld [vmem:[%s7 + $0x8] sm:$0xf]
          %v939 = vld [vmem:[%s7 + $0xc] sm:$0xf]
          %v940 = vld [vmem:[%s8] sm:$0x1]
          %v942 = vlaneseq
          %v943 = vshrl.u32 %v942, 7
          %v944 = vsub.s32 0, %v943
          %v945 = vrot.slane %v940, %v944
          %v951 = vunpack.c.l.b16 %v936
          %v952 = vunpack.c.l.b16 %v937
          %v953 = vunpack.c.l.b16 %v938
          %v954 = vunpack.c.l.b16 %v939
          %v955 = vpack.c.b16 %v952, %v951
          %v956 = vpack.c.b16 %v954, %v953
          %v960 = vsel %vm589, %v932, 0
          %v963 = vsel %vm589, %v933, 0
          %v966 = vsel %vm589, %v934, 0
          %v969 = vsel %vm589, %v935, 0
          %971 = vmatprep.subr.bf16.mxu0 0
          %972 = vmatpush1.bf16.msra.mxu0 %v955
          %973 = vmatprep.subr.bf16.mxu0 0
          %974 = vmatpush1.bf16.msra.mxu0 %v956
          %975 = vmatprep.subr.bf16.mxu0 0
          %976 = vmatpush1.bf16.msra.mxu0 0
          %977 = vmatprep.subr.bf16.mxu0 0
          %978 = vmatpush1.bf16.msra.mxu0 0
          %979 = vmatprep.subr.bf16.mxu0 0
          %980 = vmatpush1.bf16.msra.mxu0 0
          %981 = vmatprep.subr.bf16.mxu0 0
          %982 = vmatpush1.bf16.msra.mxu0 0
          %983 = vmatprep.subr.bf16.mxu0 0
          %984 = vmatpush1.bf16.msra.mxu0 0
          %985 = vmatprep.subr.bf16.mxu0 0
          %986 = vmatpush1.bf16.msra.mxu0 0
          %987 = vmatprep.subr.bf16.mxu0 0
          %988 = vmatpush1.bf16.msra.mxu0 0
          %989 = vmatprep.subr.bf16.mxu0 0
          %990 = vmatpush1.bf16.msra.mxu0 0
          %991 = vmatprep.subr.bf16.mxu0 0
          %992 = vmatpush1.bf16.msra.mxu0 0
          %993 = vmatprep.subr.bf16.mxu0 0
          %994 = vmatpush1.bf16.msra.mxu0 0
          %995 = vmatprep.subr.bf16.mxu0 0
          %996 = vmatpush1.bf16.msra.mxu0 0
          %997 = vmatprep.subr.bf16.mxu0 0
          %998 = vmatpush1.bf16.msra.mxu0 0
          %999 = vmatprep.subr.bf16.mxu0 0
          %1000 = vmatpush1.bf16.msra.mxu0 0
          %1001 = vmatprep.subr.bf16.mxu0 0
          %1002 = vmatpush1.bf16.msra.mxu0 0
          %1003 = vmatprep.mubr.bf16.mxu0 0
          %1004 = vmatmul.mubr.bf16.gmra.mrb[0].mxu0 %v960
          %v1005 = vpop.f32.mrb[0].mxu0
          %v1006 = vadd.f32 %v945, %v1005
          %v1007 = vpop.f32.mrb[0].mxu0
          %v1008 = vpop.f32.mrb[0].mxu0
          %v1009 = vadd.f32 %v945, %v1008
          %v1010 = vpop.f32.mrb[0].mxu0
          %1011 = vmatprep.mubr.bf16.mxu0 0
          %1012 = vmatmul.mubr.bf16.gmra.mrb[0].mxu0 %v963
          %v1013 = vpop.f32.mrb[0].mxu0
          %v1014 = vadd.f32 %v945, %v1013
          %v1015 = vpop.f32.mrb[0].mxu0
          %v1016 = vpop.f32.mrb[0].mxu0
          %v1017 = vadd.f32 %v945, %v1016
          %v1018 = vpop.f32.mrb[0].mxu0
          %1019 = vmatprep.mubr.bf16.mxu0 0
          %1020 = vmatmul.mubr.bf16.gmra.mrb[0].mxu0 %v966
          %v1021 = vpop.f32.mrb[0].mxu0
          %v1022 = vadd.f32 %v945, %v1021
          %v1023 = vpop.f32.mrb[0].mxu0
          %v1024 = vpop.f32.mrb[0].mxu0
          %v1025 = vadd.f32 %v945, %v1024
          %v1026 = vpop.f32.mrb[0].mxu0
          %1027 = vmatprep.mubr.bf16.mxu0 0
          %1028 = vmatmul.mubr.bf16.gmra.mrb[0].mxu0 %v969
          %v1029 = vpop.f32.mrb[0].mxu0
          %v1030 = vadd.f32 %v945, %v1029
          %v1031 = vpop.f32.mrb[0].mxu0
          %v1032 = vpop.f32.mrb[0].mxu0
          %v1033 = vadd.f32 %v945, %v1032
          %v1034 = vpop.f32.mrb[0].mxu0
          %1035 = vdwg.mxu0
          %v1036 = vtanh.pop %v1006
          %v1037 = vtanh.pop %v1009
          %v1038 = vtanh.pop %v1014
          %v1039 = vtanh.pop %v1017
          %v1040 = vtanh.pop %v1022
          %v1041 = vtanh.pop %v1025
          %v1042 = vtanh.pop %v1030
          %v1043 = vtanh.pop %v1033
          %v1044 = vpack.c.bf16 %v1037, %v1036
          %v1045 = vpack.c.bf16 %v1039, %v1038
          %v1046 = vpack.c.bf16 %v1041, %v1040
          %v1047 = vpack.c.bf16 %v1043, %v1042
          %1048 = vst.msk [vmem:[#allocation2] sm:$0xff] %vm589, %v1044
          %1049 = vst.msk [vmem:[#allocation2 + $0x8] sm:$0xff] %vm589, %v1045
          %1050 = vst.msk [vmem:[#allocation2 + $0x10] sm:$0xff] %vm589, %v1046
          %1051 = vst.msk [vmem:[#allocation2 + $0x18] sm:$0xff] %vm589, %v1047
          %v1052 = vunpack.c.l.bf16 %v1044
          %v1053 = vunpack.c.h.bf16 %v1044
          %v1054 = vunpack.c.l.bf16 %v1045
          %v1055 = vunpack.c.h.bf16 %v1045
          %v1056 = vunpack.c.l.bf16 %v1046
          %v1057 = vunpack.c.h.bf16 %v1046
          %v1058 = vunpack.c.l.bf16 %v1047
          %v1059 = vunpack.c.h.bf16 %v1047
          %v1060 = vld [vmem:[%s527] sm:$0xf]
          %v1061 = vld [vmem:[%s527 + $0x4] sm:$0xf]
          %v1062 = vld [vmem:[%s527 + $0x8] sm:$0xf]
          %v1063 = vld [vmem:[%s527 + $0xc] sm:$0xf]
          %v1064 = vld [vmem:[%s527 + $0x10] sm:$0xf]
          %v1065 = vld [vmem:[%s527 + $0x14] sm:$0xf]
          %v1066 = vld [vmem:[%s527 + $0x18] sm:$0xf]
          %v1067 = vld [vmem:[%s527 + $0x1c] sm:$0xf]
          %v1068 = vunpack.c.l.bf16 %v1060
          %v1069 = vunpack.c.l.bf16 %v1061
          %v1070 = vunpack.c.l.bf16 %v1062
          %v1071 = vunpack.c.l.bf16 %v1063
          %v1072 = vunpack.c.l.bf16 %v1064
          %v1073 = vunpack.c.l.bf16 %v1065
          %v1074 = vunpack.c.l.bf16 %v1066
          %v1075 = vunpack.c.l.bf16 %v1067
          %v1076 = vmul.f32 %v1052, %v1068
          %v1077 = vmul.f32 %v1053, %v1069
          %v1078 = vmul.f32 %v1054, %v1070
          %v1079 = vmul.f32 %v1055, %v1071
          %v1080 = vmul.f32 %v1056, %v1072
          %v1081 = vmul.f32 %v1057, %v1073
          %v1082 = vmul.f32 %v1058, %v1074
          %v1083 = vmul.f32 %v1059, %v1075
          %v1084 = vsel %vm589, %v1076, 0.0
          %1085 = vadd.xlane.f32.xlu0 %v1084
          %v1086 = vpop.xlane.xlu0 %1085
          %v1087 = vsel %vm589, %v1077, 0.0
          %1088 = vadd.xlane.f32.xlu0 %v1087
          %v1089 = vpop.xlane.xlu0 %1088
          %v1090 = vsel %vm589, %v1078, 0.0
          %1091 = vadd.xlane.f32.xlu0 %v1090
          %v1092 = vpop.xlane.xlu0 %1091
          %v1093 = vsel %vm589, %v1079, 0.0
          %1094 = vadd.xlane.f32.xlu0 %v1093
          %v1095 = vpop.xlane.xlu0 %1094
          %v1096 = vsel %vm589, %v1080, 0.0
          %1097 = vadd.xlane.f32.xlu0 %v1096
          %v1098 = vpop.xlane.xlu0 %1097
          %v1099 = vsel %vm589, %v1081, 0.0
          %1100 = vadd.xlane.f32.xlu0 %v1099
          %v1101 = vpop.xlane.xlu0 %1100
          %v1102 = vsel %vm589, %v1082, 0.0
          %1103 = vadd.xlane.f32.xlu0 %v1102
          %v1104 = vpop.xlane.xlu0 %1103
          %v1105 = vsel %vm589, %v1083, 0.0
          %1106 = vadd.xlane.f32.xlu0 %v1105
          %v1107 = vpop.xlane.xlu0 %1106
          %1108 = vst.msk [vmem:[#allocation5] sm:$0xff] %vm787, %v1086
          %1109 = vst.msk [vmem:[#allocation5 + $0x8] sm:$0xff] %vm787, %v1089
          %1110 = vst.msk [vmem:[#allocation5 + $0x10] sm:$0xff] %vm787, %v1092
          %1111 = vst.msk [vmem:[#allocation5 + $0x18] sm:$0xff] %vm787, %v1095
          %1112 = vst.msk [vmem:[#allocation5 + $0x20] sm:$0xff] %vm787, %v1098
          %1113 = vst.msk [vmem:[#allocation5 + $0x28] sm:$0xff] %vm787, %v1101
          %1114 = vst.msk [vmem:[#allocation5 + $0x30] sm:$0xff] %vm787, %v1104
          %1115 = vst.msk [vmem:[#allocation5 + $0x38] sm:$0xff] %vm787, %v1107
          %1116 = vst.msk [vmem:[#allocation3] sm:$0xff] %vm787, -inf
          %1117 = vst.msk [vmem:[#allocation3 + $0x8] sm:$0xff] %vm787, -inf
          %1118 = vst.msk [vmem:[#allocation3 + $0x10] sm:$0xff] %vm787, -inf
          %1119 = vst.msk [vmem:[#allocation3 + $0x18] sm:$0xff] %vm787, -inf
          %1120 = vst.msk [vmem:[#allocation3 + $0x20] sm:$0xff] %vm787, -inf
          %1121 = vst.msk [vmem:[#allocation3 + $0x28] sm:$0xff] %vm787, -inf
          %1122 = vst.msk [vmem:[#allocation3 + $0x30] sm:$0xff] %vm787, -inf
          %1123 = vst.msk [vmem:[#allocation3 + $0x38] sm:$0xff] %vm787, -inf
          %1124 = vst.msk [vmem:[#allocation4] sm:$0xff] %vm787, 0.0
          %1125 = vst.msk [vmem:[#allocation4 + $0x8] sm:$0xff] %vm787, 0.0
          %1126 = vst.msk [vmem:[#allocation4 + $0x10] sm:$0xff] %vm787, 0.0
          %1127 = vst.msk [vmem:[#allocation4 + $0x18] sm:$0xff] %vm787, 0.0
          %1128 = vst.msk [vmem:[#allocation4 + $0x20] sm:$0xff] %vm787, 0.0
          %1129 = vst.msk [vmem:[#allocation4 + $0x28] sm:$0xff] %vm787, 0.0
          %1130 = vst.msk [vmem:[#allocation4 + $0x30] sm:$0xff] %vm787, 0.0
          %1131 = vst.msk [vmem:[#allocation4 + $0x38] sm:$0xff] %vm787, 0.0
        $region105: #{tpu_custom_call.1} parent=96 // pred_fallthru
          _
        %v1132 = vld [vmem:[#allocation2] sm:$0xff]
        %v1133 = vld [vmem:[#allocation2 + $0x8] sm:$0xff]
        %v1134 = vld [vmem:[#allocation2 + $0x10] sm:$0xff]
        %v1135 = vld [vmem:[#allocation2 + $0x18] sm:$0xff]
        %v1136 = vld [vmem:[%s440] sm:$0xf]
        %v1137 = vld [vmem:[%s440 + $0x4] sm:$0xf]
        %v1138 = vld [vmem:[%s440 + $0x8] sm:$0xf]
        %v1139 = vld [vmem:[%s440 + $0xc] sm:$0xf]
        %v1144 = vunpack.c.l.b16 %v1136
        %v1145 = vunpack.c.l.b16 %v1137
        %v1146 = vunpack.c.l.b16 %v1138
        %v1147 = vunpack.c.l.b16 %v1139
        %v1148 = vpack.c.b16 %v1145, %v1144
        %v1149 = vpack.c.b16 %v1147, %v1146
        %vm1152 = vcmask 261120
        %v1154 = vsel %vm1152, %v1132, 0
        %v1157 = vsel %vm1152, %v1133, 0
        %v1160 = vsel %vm1152, %v1134, 0
        %v1163 = vsel %vm1152, %v1135, 0
        %1165 = vmatprep.subr.bf16.mxu0 0
        %1166 = vmatpush1.bf16.msra.mxu0 %v1148
        %1167 = vmatprep.subr.bf16.mxu0 0
        %1168 = vmatpush1.bf16.msra.mxu0 %v1149
        %1169 = vmatprep.subr.bf16.mxu0 0
        %1170 = vmatpush1.bf16.msra.mxu0 0
        %1171 = vmatprep.subr.bf16.mxu0 0
        %1172 = vmatpush1.bf16.msra.mxu0 0
        %1173 = vmatprep.subr.bf16.mxu0 0
        %1174 = vmatpush1.bf16.msra.mxu0 0
        %1175 = vmatprep.subr.bf16.mxu0 0
        %1176 = vmatpush1.bf16.msra.mxu0 0
        %1177 = vmatprep.subr.bf16.mxu0 0
        %1178 = vmatpush1.bf16.msra.mxu0 0
        %1179 = vmatprep.subr.bf16.mxu0 0
        %1180 = vmatpush1.bf16.msra.mxu0 0
        %1181 = vmatprep.subr.bf16.mxu0 0
        %1182 = vmatpush1.bf16.msra.mxu0 0
        %1183 = vmatprep.subr.bf16.mxu0 0
        %1184 = vmatpush1.bf16.msra.mxu0 0
        %1185 = vmatprep.subr.bf16.mxu0 0
        %1186 = vmatpush1.bf16.msra.mxu0 0
        %1187 = vmatprep.subr.bf16.mxu0 0
        %1188 = vmatpush1.bf16.msra.mxu0 0
        %1189 = vmatprep.subr.bf16.mxu0 0
        %1190 = vmatpush1.bf16.msra.mxu0 0
        %1191 = vmatprep.subr.bf16.mxu0 0
        %1192 = vmatpush1.bf16.msra.mxu0 0
        %1193 = vmatprep.subr.bf16.mxu0 0
        %1194 = vmatpush1.bf16.msra.mxu0 0
        %1195 = vmatprep.subr.bf16.mxu0 0
        %1196 = vmatpush1.bf16.msra.mxu0 0
        %1197 = vmatprep.mubr.bf16.mxu0 0
        %1198 = vmatmul.mubr.bf16.gmra.mrb[0].mxu0 %v1154
        %v1199 = vpop.f32.mrb[0].mxu0
        %v1200 = vadd.f32 0.0, %v1199
        %v1201 = vpop.f32.mrb[0].mxu0
        %v1202 = vpop.f32.mrb[0].mxu0
        %v1203 = vadd.f32 0.0, %v1202
        %v1204 = vpop.f32.mrb[0].mxu0
        %1205 = vmatprep.mubr.bf16.mxu0 0
        %1206 = vmatmul.mubr.bf16.gmra.mrb[0].mxu0 %v1157
        %v1207 = vpop.f32.mrb[0].mxu0
        %v1208 = vadd.f32 0.0, %v1207
        %v1209 = vpop.f32.mrb[0].mxu0
        %v1210 = vpop.f32.mrb[0].mxu0
        %v1211 = vadd.f32 0.0, %v1210
        %v1212 = vpop.f32.mrb[0].mxu0
        %1213 = vmatprep.mubr.bf16.mxu0 0
        %1214 = vmatmul.mubr.bf16.gmra.mrb[0].mxu0 %v1160
        %v1215 = vpop.f32.mrb[0].mxu0
        %v1216 = vadd.f32 0.0, %v1215
        %v1217 = vpop.f32.mrb[0].mxu0
        %v1218 = vpop.f32.mrb[0].mxu0
        %v1219 = vadd.f32 0.0, %v1218
        %v1220 = vpop.f32.mrb[0].mxu0
        %1221 = vmatprep.mubr.bf16.mxu0 0
        %1222 = vmatmul.mubr.bf16.gmra.mrb[0].mxu0 %v1163
        %v1223 = vpop.f32.mrb[0].mxu0
        %v1224 = vadd.f32 0.0, %v1223
        %v1225 = vpop.f32.mrb[0].mxu0
        %v1226 = vpop.f32.mrb[0].mxu0
        %v1227 = vadd.f32 0.0, %v1226
        %v1228 = vpop.f32.mrb[0].mxu0
        %1229 = vdwg.mxu0
        %v1230 = vlaneseq
        %v1231 = vand.u32 %v1230, 127
        %s1232 = smul.u32 %s26, 128
        %v1233 = vstv %s1232
        %v1234 = vadd.s32 %v1231, %v1233
        %vm1235 = vcmp.lt.s32.totalorder %v1234, 250
        %v1236 = vsel %vm1235, 1, 0
        %vm1237 = vcmp.eq.s32.totalorder %v1236, 1
        %v1238 = vsel %vm1237, %v1200, -1e+30
        %v1239 = vsel %vm1237, %v1203, -1e+30
        %v1240 = vsel %vm1237, %v1208, -1e+30
        %v1241 = vsel %vm1237, %v1211, -1e+30
        %v1242 = vsel %vm1237, %v1216, -1e+30
        %v1243 = vsel %vm1237, %v1219, -1e+30
        %v1244 = vsel %vm1237, %v1224, -1e+30
        %v1245 = vsel %vm1237, %v1227, -1e+30
        %v1246 = vld [vmem:[#allocation3] sm:$0xff]
        %v1247 = vld [vmem:[#allocation3 + $0x8] sm:$0xff]
        %v1248 = vld [vmem:[#allocation3 + $0x10] sm:$0xff]
        %v1249 = vld [vmem:[#allocation3 + $0x18] sm:$0xff]
        %v1250 = vld [vmem:[#allocation3 + $0x20] sm:$0xff]
        %v1251 = vld [vmem:[#allocation3 + $0x28] sm:$0xff]
        %v1252 = vld [vmem:[#allocation3 + $0x30] sm:$0xff]
        %v1253 = vld [vmem:[#allocation3 + $0x38] sm:$0xff]
        %1254 = vmax.xlane.f32.xlu0 %v1238
        %v1255 = vpop.xlane.xlu0 %1254
        %1256 = vmax.xlane.f32.xlu0 %v1239
        %v1257 = vpop.xlane.xlu0 %1256
        %1258 = vmax.xlane.f32.xlu0 %v1240
        %v1259 = vpop.xlane.xlu0 %1258
        %1260 = vmax.xlane.f32.xlu0 %v1241
        %v1261 = vpop.xlane.xlu0 %1260
        %1262 = vmax.xlane.f32.xlu0 %v1242
        %v1263 = vpop.xlane.xlu0 %1262
        %1264 = vmax.xlane.f32.xlu0 %v1243
        %v1265 = vpop.xlane.xlu0 %1264
        %1266 = vmax.xlane.f32.xlu0 %v1244
        %v1267 = vpop.xlane.xlu0 %1266
        %1268 = vmax.xlane.f32.xlu0 %v1245
        %v1269 = vpop.xlane.xlu0 %1268
        %v1270 = vmax.f32 %v1246, %v1255
        %v1271 = vmax.f32 %v1247, %v1257
        %v1272 = vmax.f32 %v1248, %v1259
        %v1273 = vmax.f32 %v1249, %v1261
        %v1274 = vmax.f32 %v1250, %v1263
        %v1275 = vmax.f32 %v1251, %v1265
        %v1276 = vmax.f32 %v1252, %v1267
        %v1277 = vmax.f32 %v1253, %v1269
        %v1278 = vld [vmem:[#allocation4] sm:$0xff]
        %v1279 = vld [vmem:[#allocation4 + $0x8] sm:$0xff]
        %v1280 = vld [vmem:[#allocation4 + $0x10] sm:$0xff]
        %v1281 = vld [vmem:[#allocation4 + $0x18] sm:$0xff]
        %v1282 = vld [vmem:[#allocation4 + $0x20] sm:$0xff]
        %v1283 = vld [vmem:[#allocation4 + $0x28] sm:$0xff]
        %v1284 = vld [vmem:[#allocation4 + $0x30] sm:$0xff]
        %v1285 = vld [vmem:[#allocation4 + $0x38] sm:$0xff]
        %v1286 = vsub.f32 %v1246, %v1270
        %v1287 = vsub.f32 %v1247, %v1271
        %v1288 = vsub.f32 %v1248, %v1272
        %v1289 = vsub.f32 %v1249, %v1273
        %v1290 = vsub.f32 %v1250, %v1274
        %v1291 = vsub.f32 %v1251, %v1275
        %v1292 = vsub.f32 %v1252, %v1276
        %v1293 = vsub.f32 %v1253, %v1277
        %v1294 = vmul.f32 %v1286, 1.442695
        %v1295 = vpow.pop %v1294
        %v1296 = vmul.f32 %v1287, 1.442695
        %v1297 = vpow.pop %v1296
        %v1298 = vmul.f32 %v1288, 1.442695
        %v1299 = vpow.pop %v1298
        %v1300 = vmul.f32 %v1289, 1.442695
        %v1301 = vpow.pop %v1300
        %v1302 = vmul.f32 %v1290, 1.442695
        %v1303 = vpow.pop %v1302
        %v1304 = vmul.f32 %v1291, 1.442695
        %v1305 = vpow.pop %v1304
        %v1306 = vmul.f32 %v1292, 1.442695
        %v1307 = vpow.pop %v1306
        %v1308 = vmul.f32 %v1293, 1.442695
        %v1309 = vpow.pop %v1308
        %v1310 = vmul.f32 %v1278, %v1295
        %v1311 = vmul.f32 %v1279, %v1297
        %v1312 = vmul.f32 %v1280, %v1299
        %v1313 = vmul.f32 %v1281, %v1301
        %v1314 = vmul.f32 %v1282, %v1303
        %v1315 = vmul.f32 %v1283, %v1305
        %v1316 = vmul.f32 %v1284, %v1307
        %v1317 = vmul.f32 %v1285, %v1309
        %1319 = vset.pattern.permute.xlu0 0
        %1320 = vperm.xlu0 %1319, %v1270
        %v1321 = vpop.permute.xlu0 %1320
        %1324 = vset.pattern.permute.xlu0 0
        %1325 = vperm.xlu0 %1324, %v1271
        %v1326 = vpop.permute.xlu0 %1325
        %1329 = vset.pattern.permute.xlu0 0
        %1330 = vperm.xlu0 %1329, %v1272
        %v1331 = vpop.permute.xlu0 %1330
        %1334 = vset.pattern.permute.xlu0 0
        %1335 = vperm.xlu0 %1334, %v1273
        %v1336 = vpop.permute.xlu0 %1335
        %1339 = vset.pattern.permute.xlu0 0
        %1340 = vperm.xlu0 %1339, %v1274
        %v1341 = vpop.permute.xlu0 %1340
        %1344 = vset.pattern.permute.xlu0 0
        %1345 = vperm.xlu0 %1344, %v1275
        %v1346 = vpop.permute.xlu0 %1345
        %1349 = vset.pattern.permute.xlu0 0
        %1350 = vperm.xlu0 %1349, %v1276
        %v1351 = vpop.permute.xlu0 %1350
        %1354 = vset.pattern.permute.xlu0 0
        %1355 = vperm.xlu0 %1354, %v1277
        %v1356 = vpop.permute.xlu0 %1355
        %v1358 = vsub.f32 %v1238, %v1321
        %v1359 = vsub.f32 %v1239, %v1326
        %v1360 = vsub.f32 %v1240, %v1331
        %v1361 = vsub.f32 %v1241, %v1336
        %v1362 = vsub.f32 %v1242, %v1341
        %v1363 = vsub.f32 %v1243, %v1346
        %v1364 = vsub.f32 %v1244, %v1351
        %v1365 = vsub.f32 %v1245, %v1356
        %v1366 = vmul.f32 %v1358, 1.442695
        %v1367 = vpow.pop %v1366
        %v1368 = vmul.f32 %v1359, 1.442695
        %v1369 = vpow.pop %v1368
        %v1370 = vmul.f32 %v1360, 1.442695
        %v1371 = vpow.pop %v1370
        %v1372 = vmul.f32 %v1361, 1.442695
        %v1373 = vpow.pop %v1372
        %v1374 = vmul.f32 %v1362, 1.442695
        %v1375 = vpow.pop %v1374
        %v1376 = vmul.f32 %v1363, 1.442695
        %v1377 = vpow.pop %v1376
        %v1378 = vmul.f32 %v1364, 1.442695
        %v1379 = vpow.pop %v1378
        %v1380 = vmul.f32 %v1365, 1.442695
        %v1381 = vpow.pop %v1380
        %1382 = vadd.xlane.f32.xlu0 %v1367
        %v1383 = vpop.xlane.xlu0 %1382
        %1384 = vadd.xlane.f32.xlu0 %v1369
        %v1385 = vpop.xlane.xlu0 %1384
        %1386 = vadd.xlane.f32.xlu0 %v1371
        %v1387 = vpop.xlane.xlu0 %1386
        %1388 = vadd.xlane.f32.xlu0 %v1373
        %v1389 = vpop.xlane.xlu0 %1388
        %1390 = vadd.xlane.f32.xlu0 %v1375
        %v1391 = vpop.xlane.xlu0 %1390
        %1392 = vadd.xlane.f32.xlu0 %v1377
        %v1393 = vpop.xlane.xlu0 %1392
        %1394 = vadd.xlane.f32.xlu0 %v1379
        %v1395 = vpop.xlane.xlu0 %1394
        %1396 = vadd.xlane.f32.xlu0 %v1381
        %v1397 = vpop.xlane.xlu0 %1396
        %v1398 = vadd.f32 %v1310, %v1383
        %v1399 = vadd.f32 %v1311, %v1385
        %v1400 = vadd.f32 %v1312, %v1387
        %v1401 = vadd.f32 %v1313, %v1389
        %v1402 = vadd.f32 %v1314, %v1391
        %v1403 = vadd.f32 %v1315, %v1393
        %v1404 = vadd.f32 %v1316, %v1395
        %v1405 = vadd.f32 %v1317, %v1397
        %vm1406 = vcmask 7168
        %1407 = vst.msk [vmem:[#allocation4] sm:$0xff] %vm1406, %v1398
        %1408 = vst.msk [vmem:[#allocation4 + $0x8] sm:$0xff] %vm1406, %v1399
        %1409 = vst.msk [vmem:[#allocation4 + $0x10] sm:$0xff] %vm1406, %v1400
        %1410 = vst.msk [vmem:[#allocation4 + $0x18] sm:$0xff] %vm1406, %v1401
        %1411 = vst.msk [vmem:[#allocation4 + $0x20] sm:$0xff] %vm1406, %v1402
        %1412 = vst.msk [vmem:[#allocation4 + $0x28] sm:$0xff] %vm1406, %v1403
        %1413 = vst.msk [vmem:[#allocation4 + $0x30] sm:$0xff] %vm1406, %v1404
        %1414 = vst.msk [vmem:[#allocation4 + $0x38] sm:$0xff] %vm1406, %v1405
        %1415 = vst.msk [vmem:[#allocation3] sm:$0xff] %vm1406, %v1270
        %1416 = vst.msk [vmem:[#allocation3 + $0x8] sm:$0xff] %vm1406, %v1271
        %1417 = vst.msk [vmem:[#allocation3 + $0x10] sm:$0xff] %vm1406, %v1272
        %1418 = vst.msk [vmem:[#allocation3 + $0x18] sm:$0xff] %vm1406, %v1273
        %1419 = vst.msk [vmem:[#allocation3 + $0x20] sm:$0xff] %vm1406, %v1274
        %1420 = vst.msk [vmem:[#allocation3 + $0x28] sm:$0xff] %vm1406, %v1275
        %1421 = vst.msk [vmem:[#allocation3 + $0x30] sm:$0xff] %vm1406, %v1276
        %1422 = vst.msk [vmem:[#allocation3 + $0x38] sm:$0xff] %vm1406, %v1277
        %p1423 = scmp.eq.s32.totalorder %s26, 1
        // Predicated region
        $region106: #{tpu_custom_call.1} parent=96 // pred_check
          %p1424 = pneg %p1423
        $region107: #{tpu_custom_call.1} parent=96 // pred_check_branch
          %1426 = sbr.rel (%p1424) target = $region109
        $region108: #{tpu_custom_call.1} parent=96 // pred_region
          %v1427 = vld [vmem:[#allocation3] sm:$0xff]
          %v1428 = vld [vmem:[#allocation3 + $0x8] sm:$0xff]
          %v1429 = vld [vmem:[#allocation3 + $0x10] sm:$0xff]
          %v1430 = vld [vmem:[#allocation3 + $0x18] sm:$0xff]
          %v1431 = vld [vmem:[#allocation3 + $0x20] sm:$0xff]
          %v1432 = vld [vmem:[#allocation3 + $0x28] sm:$0xff]
          %v1433 = vld [vmem:[#allocation3 + $0x30] sm:$0xff]
          %v1434 = vld [vmem:[#allocation3 + $0x38] sm:$0xff]
          %v1435 = vld [vmem:[#allocation4] sm:$0xff]
          %v1436 = vld [vmem:[#allocation4 + $0x8] sm:$0xff]
          %v1437 = vld [vmem:[#allocation4 + $0x10] sm:$0xff]
          %v1438 = vld [vmem:[#allocation4 + $0x18] sm:$0xff]
          %v1439 = vld [vmem:[#allocation4 + $0x20] sm:$0xff]
          %v1440 = vld [vmem:[#allocation4 + $0x28] sm:$0xff]
          %v1441 = vld [vmem:[#allocation4 + $0x30] sm:$0xff]
          %v1442 = vld [vmem:[#allocation4 + $0x38] sm:$0xff]
          %v1443 = vlog2.pop %v1435
          %v1444 = vmul.f32 %v1443, 0.6931472
          %v1445 = vlog2.pop %v1436
          %v1446 = vmul.f32 %v1445, 0.6931472
          %v1447 = vlog2.pop %v1437
          %v1448 = vmul.f32 %v1447, 0.6931472
          %v1449 = vlog2.pop %v1438
          %v1450 = vmul.f32 %v1449, 0.6931472
          %v1451 = vlog2.pop %v1439
          %v1452 = vmul.f32 %v1451, 0.6931472
          %v1453 = vlog2.pop %v1440
          %v1454 = vmul.f32 %v1453, 0.6931472
          %v1455 = vlog2.pop %v1441
          %v1456 = vmul.f32 %v1455, 0.6931472
          %v1457 = vlog2.pop %v1442
          %v1458 = vmul.f32 %v1457, 0.6931472
          %v1459 = vadd.f32 %v1427, %v1444
          %v1460 = vadd.f32 %v1428, %v1446
          %v1461 = vadd.f32 %v1429, %v1448
          %v1462 = vadd.f32 %v1430, %v1450
          %v1463 = vadd.f32 %v1431, %v1452
          %v1464 = vadd.f32 %v1432, %v1454
          %v1465 = vadd.f32 %v1433, %v1456
          %v1466 = vadd.f32 %v1434, %v1458
          %v1467 = vld [vmem:[#allocation5] sm:$0xff]
          %v1468 = vld [vmem:[#allocation5 + $0x8] sm:$0xff]
          %v1469 = vld [vmem:[#allocation5 + $0x10] sm:$0xff]
          %v1470 = vld [vmem:[#allocation5 + $0x18] sm:$0xff]
          %v1471 = vld [vmem:[#allocation5 + $0x20] sm:$0xff]
          %v1472 = vld [vmem:[#allocation5 + $0x28] sm:$0xff]
          %v1473 = vld [vmem:[#allocation5 + $0x30] sm:$0xff]
          %v1474 = vld [vmem:[#allocation5 + $0x38] sm:$0xff]
          %v1475 = vsub.f32 %v1467, %v1459
          %v1476 = vsub.f32 %v1468, %v1460
          %v1477 = vsub.f32 %v1469, %v1461
          %v1478 = vsub.f32 %v1470, %v1462
          %v1479 = vsub.f32 %v1471, %v1463
          %v1480 = vsub.f32 %v1472, %v1464
          %v1481 = vsub.f32 %v1473, %v1465
          %v1482 = vsub.f32 %v1474, %v1466
          %v1483 = vld [vmem:[%s521] sm:$0xff]
          %v1484 = vld [vmem:[%s521 + $0x8] sm:$0xff]
          %v1485 = vld [vmem:[%s521 + $0x10] sm:$0xff]
          %v1486 = vld [vmem:[%s521 + $0x18] sm:$0xff]
          %v1487 = vld [vmem:[%s521 + $0x20] sm:$0xff]
          %v1488 = vld [vmem:[%s521 + $0x28] sm:$0xff]
          %v1489 = vld [vmem:[%s521 + $0x30] sm:$0xff]
          %v1490 = vld [vmem:[%s521 + $0x38] sm:$0xff]
          %v1491 = vmul.f32 %v1475, %v1483
          %v1492 = vmul.f32 %v1476, %v1484
          %v1493 = vmul.f32 %v1477, %v1485
          %v1494 = vmul.f32 %v1478, %v1486
          %v1495 = vmul.f32 %v1479, %v1487
          %v1496 = vmul.f32 %v1480, %v1488
          %v1497 = vmul.f32 %v1481, %v1489
          %v1498 = vmul.f32 %v1482, %v1490
          %1507 = vset.pattern.permute.xlu0 0
          %1508 = vperm.xlu0 %1507, %v1491
          %v1509 = vpop.permute.xlu0 %1508
          %1510 = vset.pattern.permute.xlu0 0
          %1511 = vperm.xlu0 %1510, %v1492
          %v1512 = vpop.permute.xlu0 %1511
          %1513 = vset.pattern.permute.xlu0 0
          %1514 = vperm.xlu0 %1513, %v1493
          %v1515 = vpop.permute.xlu0 %1514
          %1516 = vset.pattern.permute.xlu0 0
          %1517 = vperm.xlu0 %1516, %v1494
          %v1518 = vpop.permute.xlu0 %1517
          %1519 = vset.pattern.permute.xlu0 0
          %1520 = vperm.xlu0 %1519, %v1495
          %v1521 = vpop.permute.xlu0 %1520
          %1522 = vset.pattern.permute.xlu0 0
          %1523 = vperm.xlu0 %1522, %v1496
          %v1524 = vpop.permute.xlu0 %1523
          %1525 = vset.pattern.permute.xlu0 0
          %1526 = vperm.xlu0 %1525, %v1497
          %v1527 = vpop.permute.xlu0 %1526
          %1528 = vset.pattern.permute.xlu0 0
          %1529 = vperm.xlu0 %1528, %v1498
          %v1530 = vpop.permute.xlu0 %1529
          %v1531 = vlaneseq
          %v1532 = vshrl.u32 %v1531, 7
          %v1533 = vsub.s32 %v1231, %v1532
          %v1534 = vrot.slane %v1509, %v1533
          %v1535 = vlaneseq
          %v1536 = vshrl.u32 %v1535, 7
          %v1537 = vsub.s32 %v1231, %v1536
          %v1538 = vrot.slane %v1512, %v1537
          %v1539 = vlaneseq
          %v1540 = vshrl.u32 %v1539, 7
          %v1541 = vsub.s32 %v1231, %v1540
          %v1542 = vrot.slane %v1515, %v1541
          %v1543 = vlaneseq
          %v1544 = vshrl.u32 %v1543, 7
          %v1545 = vsub.s32 %v1231, %v1544
          %v1546 = vrot.slane %v1518, %v1545
          %v1547 = vlaneseq
          %v1548 = vshrl.u32 %v1547, 7
          %v1549 = vsub.s32 %v1231, %v1548
          %v1550 = vrot.slane %v1521, %v1549
          %v1551 = vlaneseq
          %v1552 = vshrl.u32 %v1551, 7
          %v1553 = vsub.s32 %v1231, %v1552
          %v1554 = vrot.slane %v1524, %v1553
          %v1555 = vlaneseq
          %v1556 = vshrl.u32 %v1555, 7
          %v1557 = vsub.s32 %v1231, %v1556
          %v1558 = vrot.slane %v1527, %v1557
          %v1559 = vlaneseq
          %v1560 = vshrl.u32 %v1559, 7
          %v1561 = vsub.s32 %v1231, %v1560
          %v1562 = vrot.slane %v1530, %v1561
          %vm1563 = vcmask 1041409
          %v1564 = vsel %vm1563, %v1538, %v1534
          %vm1565 = vcmask 1042434
          %v1566 = vsel %vm1565, %v1542, %v1564
          %vm1567 = vcmask 1043459
          %v1568 = vsel %vm1567, %v1546, %v1566
          %vm1569 = vcmask 1044484
          %v1570 = vsel %vm1569, %v1550, %v1568
          %vm1571 = vcmask 1045509
          %v1572 = vsel %vm1571, %v1554, %v1570
          %vm1573 = vcmask 1046534
          %v1574 = vsel %vm1573, %v1558, %v1572
          %vm1575 = vcmask 1047559
          %v1576 = vsel %vm1575, %v1562, %v1574
          %vm1578 = vcmask 64512
          %v1579 = vsel %vm1578, %v1576, 0.0
          %1580 = vadd.xlane.f32.xlu0 %v1579
          %v1581 = vpop.xlane.xlu0 %1580
          %1582 = vst.msk [vmem:[%s532] sm:$0xff] %vm1406, %v1581
        $region109: #{tpu_custom_call.1} parent=96 // pred_fallthru
          _
        %p1583 = scmp.lt.s32.totalorder %s25, 0
        %s1584 = scalar_select %p1583, %s25, 0
        %s1585 = smul.addr %s1584, 8
        %s1586 = scalar_lea.vmem %s10, %s1585
        // Predicated region
        $region110: #{tpu_custom_call.1} parent=96 // pred_check
          %p1587 = pneg %p291
        $region111: #{tpu_custom_call.1} parent=96 // pred_check_branch
          %1589 = sbr.rel (%p1587) target = $region113
        $region112: #{tpu_custom_call.1} parent=96 // pred_region
          _
        $region113: #{tpu_custom_call.1} parent=96 // pred_fallthru
          _
        // Predicated region
        $region114: #{tpu_custom_call.1} parent=96 // pred_check
          %p1590 = pneg %p291
        $region115: #{tpu_custom_call.1} parent=96 // pred_check_branch
          %1592 = sbr.rel (%p1590) target = $region117
        $region116: #{tpu_custom_call.1} parent=96 // pred_region
          %p1593 = scmp.lt.s32.totalorder %s25, 0
          %s1594 = scalar_select %p1593, %s25, 0
          %s1595 = smul.addr %s1594, 8
          %s1596 = scalar_lea.vmem %s10, %s1595
        $region117: #{tpu_custom_call.1} parent=96 // pred_fallthru
          _
      $region97: #{tpu_custom_call.1} parent=5 // pred_fallthru
        _
      %p1597 = scmp.le.s32.totalorder 2, %s16
      // Predicated region
      $region118: #{tpu_custom_call.1} parent=5 // pred_check
        %p1598 = pneg %p1597
      $region119: #{tpu_custom_call.1} parent=5 // pred_check_branch
        %1600 = sbr.rel (%p1598) target = $region121
      $region120: #{tpu_custom_call.1} parent=5 // pred_region
        %s1601 = ssub.s32 %s16, 2
      $region121: #{tpu_custom_call.1} parent=5 // pred_fallthru
        _
    $region6: #{tpu_custom_call.1} parent=1 // loop_footer
      %s20 = sadd.s32 1, %s16
    $region7: #{tpu_custom_call.1} parent=1 // loop_footer_branch
      %15 = sbr.rel target = $region3
    $region8: #{tpu_custom_call.1} parent=1 // loop_exit
      _

</llo_original>
